<compile_context>
chip_gen: v7x
topology: tpu7x:2x2x1
jax: 0.10.0
libtpu: 0.0.40
codegen_flags: <defaults>
</compile_context>

<pallas_src>
import jax
import jax.numpy as jnp
from jax.experimental import pallas as pl
from jax.experimental.pallas import tpu as pltpu

n_size = 4          # latent dim (== classifier input dim in the torch module)
n_classes = 10

N_PAD = 128         # lane-dense width for all small operands / the output
LV_OFF = 16         # lane offset where the logvar head lives (lanes [16, 20))


def _round_up(x, m):
    return (x + m - 1) // m * m


# ---------------------------------------------------------------------------
# Kernel: one fused big-K bf16 matmul pair (f32 accumulation), reparameterize on
# the logvar lanes, then one tiny matmul drops the noise contribution into the
# logit lanes. All operands lane-dense; x/y cast to bf16 on the VPU in-kernel.
# ---------------------------------------------------------------------------
def classifier_v_kernel(x_ref, y_ref, wtop_ref, wbot_ref, b_ref, eps_ref, wc_ref,
                        out_ref):
    # In-kernel bf16 cast of the streamed activations (review item 1): the cast
    # rides under the f32 input DMA instead of a separate host-side XLA pass.
    xb = x_ref[...].astype(jnp.bfloat16)
    yb = y_ref[...].astype(jnp.bfloat16)

    # enc lanes [0, 10)            = x @ (w_mu @ w_cls) + b_mu @ w_cls + b_cls  (folded mu path)
    # enc lanes [LV_OFF, LV_OFF+4) = logvar head
    enc = (jnp.dot(xb, wtop_ref[...], preferred_element_type=jnp.float32)
           + jnp.dot(yb, wbot_ref[...], preferred_element_type=jnp.float32)
           + b_ref[...])                                           # [TB, 128] f32

    # Reparameterize only on the logvar lanes. Zero every other lane BEFORE the
    # exp so a large folded logit can never produce inf * 0 = nan.
    lane = jax.lax.broadcasted_iota(jnp.int32, enc.shape, 1)
    lv = jnp.where((lane >= LV_OFF) & (lane < LV_OFF + n_size), enc, 0.0)
    # eps arrives bf16 (half the HBM stream); elementwise math stays f32 (v5e-safe).
    noise = jnp.exp(0.5 * lv) * eps_ref[...].astype(jnp.float32)

    # (std * eps) @ w_cls lands in lanes [0, 10), aligned with the folded logits.
    corr = jnp.dot(noise.astype(jnp.bfloat16), wc_ref[...],
                   preferred_element_type=jnp.float32)             # [TB, 128]

    # Lanes [0, 10) now hold the logits; the rest is junk the wrapper slices off.
    out_ref[...] = (enc + corr).astype(out_ref.dtype)


# ---------------------------------------------------------------------------
# Host-side (traced-once) operand folding / lane packing shared by the forward
# wrapper and the mirror reference. NOTE: x / y are NOT cast here (review item 1).
# ---------------------------------------------------------------------------
def _prepare_operands(x, y_true, params, eps, compute_dtype=jnp.bfloat16):
    B, C, H, W = x.shape
    d_half = C * H * W
    d_in = 2 * d_half
    w_mu, b_mu, w_lv, b_lv, w_cls, b_cls = params

    # Fold the mu head through the classifier:
    #   v @ w_cls + b_cls = x @ (w_mu @ w_cls) + (b_mu @ w_cls + b_cls)
    #                       + (exp(0.5*lv) * eps) @ w_cls
    w_fold = w_mu @ w_cls                                  # [D_in, 10]
    b_fold = b_mu @ w_cls + b_cls                          # [1, 10]

    # Lane-dense packing: cols [0,10) = folded classifier, cols [16,20) = logvar head.
    w_comb = jnp.zeros((d_in, N_PAD), jnp.float32)
    w_comb = w_comb.at[:, :n_classes].set(w_fold)
    w_comb = w_comb.at[:, LV_OFF:LV_OFF + n_size].set(w_lv)
    b_comb = jnp.zeros((1, N_PAD), jnp.float32)
    b_comb = b_comb.at[:, :n_classes].set(b_fold)
    b_comb = b_comb.at[:, LV_OFF:LV_OFF + n_size].set(b_lv)
    wc_pad = jnp.zeros((N_PAD, N_PAD), jnp.float32)
    wc_pad = wc_pad.at[LV_OFF:LV_OFF + n_size, :n_classes].set(w_cls)

    # Row-split the combined weight so cat([x, y_true], 1) never materializes:
    #   cat([x, y]) @ W_comb == x @ W_top + y @ W_bot
    # Weights are tiny & resident -> pre-cast once to bf16 (negligible traffic).
    w_top = w_comb[:d_half].astype(compute_dtype)
    w_bot = w_comb[d_half:].astype(compute_dtype)
    wc_pad = wc_pad.astype(compute_dtype)

    # Flattened NCHW views of the f32 activations (free reshape, no cast, no copy).
    x_flat = x.reshape(B, d_half)
    y_flat = y_true.reshape(B, d_half)

    # eps packed into the logvar lanes, shipped as bf16 (review item 3 minimum).
    eps_pad = (jnp.zeros((B, N_PAD), compute_dtype)
               .at[:, LV_OFF:LV_OFF + n_size].set(eps.astype(compute_dtype)))

    return x_flat, y_flat, w_top, w_bot, b_comb, eps_pad, wc_pad


# ---------------------------------------------------------------------------
# Tile selection (review item 4): generation-aware cap + guarantee >= 2 grid
# steps when the batch allows it (dual TensorCores on v7x).
# ---------------------------------------------------------------------------
def _default_tile_cap():
    # v5e / v6e: 128 MiB physical VMEM -> 2048-row tiles. v7x: 64 MiB -> 1024.
    try:
        vmem = pltpu.get_tpu_info().vmem_capacity_bytes
    except Exception:
        return 1024
    return 2048 if vmem >= (96 << 20) else 1024


def _choose_tile(B, cap):
    cap = max(8, _round_up(int(cap), 8))
    if B <= 8:
        return B                     # single full-extent block (block == full dim)
    # Split into at least 2 sublane-aligned tiles so ("parallel",) can shard
    # across v7x's two TensorCores; cap keeps the tile inside the VMEM budget.
    half = _round_up(_round_up(B, 8) // 2, 8)
    return min(cap, half)


def classifier_v_forward(x, y_true, params, eps, *, tile_b=None):
    """x, y_true: [B, C, H, W] float32 (NCHW). eps: [B, n_size] f32. Returns [B, 10] f32."""
    B = x.shape[0]
    x_flat, y_flat, w_top, w_bot, b_comb, eps_pad, wc_pad = _prepare_operands(
        x, y_true, params, eps)
    d_half = x_flat.shape[1]

    cap = tile_b if tile_b is not None else _default_tile_cap()
    tile = _choose_tile(B, cap)
    num_tiles = pl.cdiv(B, tile)          # ragged last block handled by Pallas (no jnp.pad)

    # f32 input tiles, double-buffered, + bf16 cast temporaries + resident weights:
    # ~18 MiB at tile=1024, ~37 MiB at tile=2048 -> raise the scoped VMEM limit.
    vmem_limit = (60 << 20) if tile > 1024 else (44 << 20)

    out = pl.pallas_call(
        classifier_v_kernel,
        out_shape=jax.ShapeDtypeStruct((B, N_PAD), jnp.float32),
        grid_spec=pltpu.PrefetchScalarGridSpec(
            num_scalar_prefetch=0,
            grid=(num_tiles,),
            in_specs=[
                pl.BlockSpec((tile, d_half), lambda i: (i, 0)),    # x half (f32)
                pl.BlockSpec((tile, d_half), lambda i: (i, 0)),    # y_true half (f32)
                pl.BlockSpec((d_half, N_PAD), lambda i: (0, 0)),   # W_top (resident, bf16)
                pl.BlockSpec((d_half, N_PAD), lambda i: (0, 0)),   # W_bot (resident, bf16)
                pl.BlockSpec((1, N_PAD), lambda i: (0, 0)),        # packed bias (f32)
                pl.BlockSpec((tile, N_PAD), lambda i: (i, 0)),     # eps (bf16, lane-packed)
                pl.BlockSpec((N_PAD, N_PAD), lambda i: (0, 0)),    # w_cls (resident, bf16)
            ],
            out_specs=pl.BlockSpec((tile, N_PAD), lambda i: (i, 0)),
        ),
        compiler_params=pltpu.CompilerParams(
            dimension_semantics=("parallel",),   # batch tiles shard across v7x's 2 TCs
            vmem_limit_bytes=vmem_limit,
        ),
    )(x_flat, y_flat, w_top, w_bot, b_comb, eps_pad, wc_pad)

    return out[:, :n_classes]


# ---------------------------------------------------------------------------
# References for correctness checks.
# ---------------------------------------------------------------------------
def classifier_v_ref_mirror(x, y_true, params, eps):
    """Pure-JAX mirror of the exact kernel math (folding, bf16 MXU inputs, bf16 eps)."""
    x_flat, y_flat, w_top, w_bot, b_comb, eps_pad, wc_pad = _prepare_operands(
        x, y_true, params, eps)
    enc = (jnp.dot(x_flat.astype(jnp.bfloat16), w_top, preferred_element_type=jnp.float32)
           + jnp.dot(y_flat.astype(jnp.bfloat16), w_bot, preferred_element_type=jnp.float32)
           + b_comb)
    lane = jax.lax.broadcasted_iota(jnp.int32, enc.shape, 1)
    lv = jnp.where((lane >= LV_OFF) & (lane < LV_OFF + n_size), enc, 0.0)
    noise = jnp.exp(0.5 * lv) * eps_pad.astype(jnp.float32)
    corr = jnp.dot(noise.astype(jnp.bfloat16), wc_pad, preferred_element_type=jnp.float32)
    return (enc + corr)[:, :n_classes]


def classifier_v_ref_f32(x, y_true, params, eps):
    """Original-module semantics, pure f32, unfused/unfolded."""
    B = x.shape[0]
    in_motion = jnp.concatenate([x, y_true], axis=1).reshape(B, -1)
    w_mu, b_mu, w_lv, b_lv, w_cls, b_cls = params
    mu = in_motion @ w_mu + b_mu
    lv = in_motion @ w_lv + b_lv
    v = mu + jnp.exp(0.5 * lv) * eps
    return v @ w_cls + b_cls


if __name__ == "__main__":
    # Small shapes consistent with the forward: NCHW inputs, channel concat, flatten.
    C, H, W = 4, 16, 16
    D_in = 2 * C * H * W  # 2048

    key = jax.random.PRNGKey(0)
    k_wmu, k_wlv, k_wc, k_bmu, k_blv, k_bc, k_data = jax.random.split(key, 7)

    # Deterministic synthetic parameters.
    # NOTE: `self.model` is external in the torch code; encode_motion is modeled
    # as two Linear heads (D_in -> n_size) producing mu / logvar.
    scale_enc = 1.0 / jnp.sqrt(jnp.float32(D_in))
    scale_cls = 1.0 / jnp.sqrt(jnp.float32(n_size))
    w_mu = jax.random.normal(k_wmu, (D_in, n_size), jnp.float32) * scale_enc
    w_lv = jax.random.normal(k_wlv, (D_in, n_size), jnp.float32) * scale_enc
    b_mu = jax.random.normal(k_bmu, (1, n_size), jnp.float32) * scale_enc
    b_lv = jax.random.normal(k_blv, (1, n_size), jnp.float32) * scale_enc
    w_cls = jax.random.normal(k_wc, (n_size, n_classes), jnp.float32) * scale_cls
    b_cls = jax.random.normal(k_bc, (1, n_classes), jnp.float32) * scale_cls
    params = (w_mu, b_mu, w_lv, b_lv, w_cls, b_cls)

    fwd = jax.jit(classifier_v_forward)

    # B=2: single full-extent block. B=20: exercises the ragged last block
    # (tile=16, grid=2) now that the host-side jnp.pad is gone.
    for B in (2, 20):
        kb = jax.random.fold_in(k_data, B)
        k_x, k_y, k_eps = jax.random.split(kb, 3)
        x = jax.random.normal(k_x, (B, C, H, W), dtype=jnp.float32)
        y_true = jax.random.normal(k_y, (B, C, H, W), dtype=jnp.float32)  # state[tb.Y_TRUE]
        # Deterministic reparameterization noise (torch uses randn_like per call).
        # TODO(synk): generate eps in-kernel with pltpu.prng_seed/prng_random_bits
        # (seed must fold in pl.program_id(0)) to remove this input stream entirely.
        eps = jax.random.normal(k_eps, (B, n_size), jnp.float32)

        out = jax.block_until_ready(fwd(x, y_true, params, eps))
        assert out.shape == (B, n_classes)

        # Tight check against an exact mirror of the kernel math.
        mirror = classifier_v_ref_mirror(x, y_true, params, eps)
        assert jnp.allclose(out, mirror, atol=5e-3, rtol=5e-3), \
            f"mirror mismatch (B={B}): {jnp.max(jnp.abs(out - mirror))}"

        # Semantic check against the original f32 module math (bf16 MXU inputs and
        # bf16 eps feed exp(), which amplifies rounding -> loose tolerance).
        ref = classifier_v_ref_f32(x, y_true, params, eps)
        assert jnp.allclose(out, ref, atol=1e-1, rtol=1e-1), \
            f"semantic mismatch (B={B}): {jnp.max(jnp.abs(out - ref))}"

    print("KERNEL_OK")
</pallas_src>

<mosaic_0001>
module attributes {stable_mosaic.version = 11 : i64} {
  func.func @classifier_v_kernel(%arg0: i32, %arg1: memref<2x1024xf32, #tpu.memory_space<vmem>>, %arg2: memref<2x1024xf32, #tpu.memory_space<vmem>>, %arg3: memref<1024x128xbf16, #tpu.memory_space<vmem>>, %arg4: memref<1024x128xbf16, #tpu.memory_space<vmem>>, %arg5: memref<1x128xf32, #tpu.memory_space<vmem>>, %arg6: memref<2x128xbf16, #tpu.memory_space<vmem>>, %arg7: memref<128x128xbf16, #tpu.memory_space<vmem>>, %arg8: memref<2x128xf32, #tpu.memory_space<vmem>>) attributes {dimension_semantics = [#tpu.dimension_semantics<parallel>], iteration_bounds = array<i64: 1>, scalar_prefetch = 0 : i64, scratch_operands = 0 : i64, tpu.core_type = #tpu.core_type<tc>, window_params = [{transform_indices = @transform_0, window_bounds = array<i64: 2, 1024>}, {transform_indices = @transform_1, window_bounds = array<i64: 2, 1024>}, {pipeline_mode = #tpu.pipeline_mode<synchronous>, transform_indices = @transform_2, window_bounds = array<i64: 1024, 128>}, {pipeline_mode = #tpu.pipeline_mode<synchronous>, transform_indices = @transform_3, window_bounds = array<i64: 1024, 128>}, {pipeline_mode = #tpu.pipeline_mode<synchronous>, transform_indices = @transform_4, window_bounds = array<i64: 1, 128>}, {transform_indices = @transform_5, window_bounds = array<i64: 2, 128>}, {pipeline_mode = #tpu.pipeline_mode<synchronous>, transform_indices = @transform_6, window_bounds = array<i64: 128, 128>}, {transform_indices = @transform_7, window_bounds = array<i64: 2, 128>}]} {
    %c0 = arith.constant 0 : index
    %c0_0 = arith.constant 0 : index
    %0 = vector.load %arg1[%c0, %c0_0] : memref<2x1024xf32, #tpu.memory_space<vmem>>, vector<2x1024xf32>
    %1 = arith.truncf %0 : vector<2x1024xf32> to vector<2x1024xbf16>
    %c0_1 = arith.constant 0 : index
    %c0_2 = arith.constant 0 : index
    %2 = vector.load %arg2[%c0_1, %c0_2] : memref<2x1024xf32, #tpu.memory_space<vmem>>, vector<2x1024xf32>
    %3 = arith.truncf %2 : vector<2x1024xf32> to vector<2x1024xbf16>
    %c0_3 = arith.constant 0 : index
    %c0_4 = arith.constant 0 : index
    %4 = vector.load %arg3[%c0_3, %c0_4] : memref<1024x128xbf16, #tpu.memory_space<vmem>>, vector<1024x128xbf16>
    %cst = arith.constant dense<0.000000e+00> : vector<2x128xf32>
    %5 = tpu.matmul %1, %4, %cst {dimension_numbers = #tpu.dot_dimension_numbers<[1], [0], [0], [1], [0, 0, 1, 1], [], []>} : vector<2x1024xbf16>, vector<1024x128xbf16>, vector<2x128xf32> -> vector<2x128xf32>
    %c0_5 = arith.constant 0 : index
    %c0_6 = arith.constant 0 : index
    %6 = vector.load %arg4[%c0_5, %c0_6] : memref<1024x128xbf16, #tpu.memory_space<vmem>>, vector<1024x128xbf16>
    %cst_7 = arith.constant dense<0.000000e+00> : vector<2x128xf32>
    %7 = tpu.matmul %3, %6, %cst_7 {dimension_numbers = #tpu.dot_dimension_numbers<[1], [0], [0], [1], [0, 0, 1, 1], [], []>} : vector<2x1024xbf16>, vector<1024x128xbf16>, vector<2x128xf32> -> vector<2x128xf32>
    %8 = arith.addf %5, %7 : vector<2x128xf32>
    %c0_8 = arith.constant 0 : index
    %c0_9 = arith.constant 0 : index
    %9 = vector.load %arg5[%c0_8, %c0_9] : memref<1x128xf32, #tpu.memory_space<vmem>>, vector<1x128xf32>
    %10 = vector.broadcast %9 : vector<1x128xf32> to vector<2x128xf32>
    %11 = arith.addf %8, %10 : vector<2x128xf32>
    %12 = tpu.iota {dimensions = array<i32: 1>} : vector<2x128xi32>
    %c16_i32 = arith.constant 16 : i32
    %13 = vector.broadcast %c16_i32 : i32 to vector<2x128xi32>
    %14 = arith.cmpi sge, %12, %13 : vector<2x128xi32>
    %c20_i32 = arith.constant 20 : i32
    %15 = vector.broadcast %c20_i32 : i32 to vector<2x128xi32>
    %16 = arith.cmpi slt, %12, %15 : vector<2x128xi32>
    %17 = arith.andi %14, %16 : vector<2x128xi1>
    %cst_10 = arith.constant 0.000000e+00 : f32
    %18 = vector.broadcast %cst_10 : f32 to vector<2x128xf32>
    %19 = arith.select %17, %11, %18 : vector<2x128xi1>, vector<2x128xf32>
    %cst_11 = arith.constant 5.000000e-01 : f32
    %20 = vector.broadcast %cst_11 : f32 to vector<2x128xf32>
    %21 = arith.mulf %20, %19 : vector<2x128xf32>
    %22 = math.exp %21 : vector<2x128xf32>
    %c0_12 = arith.constant 0 : index
    %c0_13 = arith.constant 0 : index
    %23 = vector.load %arg6[%c0_12, %c0_13] : memref<2x128xbf16, #tpu.memory_space<vmem>>, vector<2x128xbf16>
    %24 = arith.extf %23 : vector<2x128xbf16> to vector<2x128xf32>
    %25 = arith.mulf %22, %24 : vector<2x128xf32>
    %26 = arith.truncf %25 : vector<2x128xf32> to vector<2x128xbf16>
    %c0_14 = arith.constant 0 : index
    %c0_15 = arith.constant 0 : index
    %27 = vector.load %arg7[%c0_14, %c0_15] : memref<128x128xbf16, #tpu.memory_space<vmem>>, vector<128x128xbf16>
    %cst_16 = arith.constant dense<0.000000e+00> : vector<2x128xf32>
    %28 = tpu.matmul %26, %27, %cst_16 {dimension_numbers = #tpu.dot_dimension_numbers<[1], [0], [0], [1], [0, 0, 1, 1], [], []>} : vector<2x128xbf16>, vector<128x128xbf16>, vector<2x128xf32> -> vector<2x128xf32>
    %29 = arith.addf %11, %28 : vector<2x128xf32>
    %c0_17 = arith.constant 0 : index
    %c0_18 = arith.constant 0 : index
    %30 = vector.load %arg8[%c0_17, %c0_18] : memref<2x128xf32, #tpu.memory_space<vmem>>, vector<2x128xf32>
    tpu.vector_store %arg8[%c0_17, %c0_18], %29 {strides = array<i32>} : memref<2x128xf32, #tpu.memory_space<vmem>>, vector<2x128xf32>,
    return
  }
  func.func @transform_0(%arg0: i32) -> (i32, i32) {
    %c0_i32 = arith.constant 0 : i32
    %c0_i32_0 = arith.constant 0 : i32
    return %arg0, %c0_i32 : i32, i32
  }
  func.func @transform_1(%arg0: i32) -> (i32, i32) {
    %c0_i32 = arith.constant 0 : i32
    %c0_i32_0 = arith.constant 0 : i32
    return %arg0, %c0_i32 : i32, i32
  }
  func.func @transform_2(%arg0: i32) -> (i32, i32) {
    %c0_i32 = arith.constant 0 : i32
    %c0_i32_0 = arith.constant 0 : i32
    %c0_i32_1 = arith.constant 0 : i32
    return %c0_i32, %c0_i32_0 : i32, i32
  }
  func.func @transform_3(%arg0: i32) -> (i32, i32) {
    %c0_i32 = arith.constant 0 : i32
    %c0_i32_0 = arith.constant 0 : i32
    %c0_i32_1 = arith.constant 0 : i32
    return %c0_i32, %c0_i32_0 : i32, i32
  }
  func.func @transform_4(%arg0: i32) -> (i32, i32) {
    %c0_i32 = arith.constant 0 : i32
    %c0_i32_0 = arith.constant 0 : i32
    %c0_i32_1 = arith.constant 0 : i32
    return %c0_i32, %c0_i32_0 : i32, i32
  }
  func.func @transform_5(%arg0: i32) -> (i32, i32) {
    %c0_i32 = arith.constant 0 : i32
    %c0_i32_0 = arith.constant 0 : i32
    return %arg0, %c0_i32 : i32, i32
  }
  func.func @transform_6(%arg0: i32) -> (i32, i32) {
    %c0_i32 = arith.constant 0 : i32
    %c0_i32_0 = arith.constant 0 : i32
    %c0_i32_1 = arith.constant 0 : i32
    return %c0_i32, %c0_i32_0 : i32, i32
  }
  func.func @transform_7(%arg0: i32) -> (i32, i32) {
    %c0_i32 = arith.constant 0 : i32
    %c0_i32_0 = arith.constant 0 : i32
    return %arg0, %c0_i32 : i32, i32
  }
}

</mosaic_0001>

<llo_original>
// kernel: classifier_v_forward.1
$region0: #{classifier_v_forward.1}
  #allocation0 [shape = 'u32[]', space=smem, size = 0x4, offset = 0x4, fixed_abs, tag = 'smem constant byte address 0x4 - core index']
  #allocation1 [shape = 'u32[144,128]{1,0:T(1,128)}', space=vmem, size = 0x12000, scoped, tag = 'internal scratch']
  %s0 = inlined_call_operand.vmem [shape: f32[2,1024], index: 0, kind: input, shape index: {}]
  %s1 = inlined_call_operand.vmem [shape: f32[2,1024], index: 1, kind: input, shape index: {}]
  %s2 = inlined_call_operand.vmem [shape: bf16[1024,128], index: 2, kind: input, shape index: {}]
  %s3 = inlined_call_operand.vmem [shape: bf16[1024,128], index: 3, kind: input, shape index: {}]
  %s4 = inlined_call_operand.vmem [shape: f32[1,128], index: 4, kind: input, shape index: {}]
  %s5 = inlined_call_operand.vmem [shape: bf16[2,128], index: 5, kind: input, shape index: {}]
  %s6 = inlined_call_operand.vmem [shape: bf16[128,128], index: 6, kind: input, shape index: {}]
  %s7 = inlined_call_operand.hbm [shape: f32[2,128], index: 7, kind: output, shape index: {}]
  %s8 = sld [smem:[#allocation0]]
  $region38: #{classifier_v_forward.1} parent=0
    _
  %s10 = ssub.s32 1, %s8
  %s11 = scalar_select 0, %s10, %s8
  $region1: #{classifier_v_forward.1} parent=0
    #allocation2 [shape = 'u8[1024]{0}', space=vmem, size = 0x400, scoped, tag = 'output window, operand 0, single buffered']
    #allocation3 [shape = 's32[1]{0}', space=sflag, size = 0x4, scoped, tag = 'scoped memory for classifier_v_forward.1']
    %12 = vsyncpa [#allocation3], 0
    // Predicated region
    $region2: #{classifier_v_forward.1} parent=1 // pred_check
      _
    $region3: #{classifier_v_forward.1} parent=1 // pred_check_branch
      %14 = sbr.rel (0) target = $region5
    $region4: #{classifier_v_forward.1} parent=1 // pred_region
      _
    $region5: #{classifier_v_forward.1} parent=1 // pred_fallthru
      _
    // Predicated region
    $region6: #{classifier_v_forward.1} parent=1 // pred_check
      _
    $region7: #{classifier_v_forward.1} parent=1 // pred_check_branch
      %16 = sbr.rel (0) target = $region9
    $region8: #{classifier_v_forward.1} parent=1 // pred_region
      _
    $region9: #{classifier_v_forward.1} parent=1 // pred_fallthru
      _
    // Predicated region
    $region10: #{classifier_v_forward.1} parent=1 // pred_check
      _
    $region11: #{classifier_v_forward.1} parent=1 // pred_check_branch
      %18 = sbr.rel (0) target = $region13
    $region12: #{classifier_v_forward.1} parent=1 // pred_region
      _
    $region13: #{classifier_v_forward.1} parent=1 // pred_fallthru
      _
    // Predicated region
    $region14: #{classifier_v_forward.1} parent=1 // pred_check
      _
    $region15: #{classifier_v_forward.1} parent=1 // pred_check_branch
      %20 = sbr.rel (0) target = $region17
    $region16: #{classifier_v_forward.1} parent=1 // pred_region
      _
    $region17: #{classifier_v_forward.1} parent=1 // pred_fallthru
      _
    // Predicated region
    $region18: #{classifier_v_forward.1} parent=1 // pred_check
      _
    $region19: #{classifier_v_forward.1} parent=1 // pred_check_branch
      %22 = sbr.rel (0) target = $region21
    $region20: #{classifier_v_forward.1} parent=1 // pred_region
      _
    $region21: #{classifier_v_forward.1} parent=1 // pred_fallthru
      _
    // Predicated region
    $region22: #{classifier_v_forward.1} parent=1 // pred_check
      _
    $region23: #{classifier_v_forward.1} parent=1 // pred_check_branch
      %24 = sbr.rel (0) target = $region25
    $region24: #{classifier_v_forward.1} parent=1 // pred_region
      _
    $region25: #{classifier_v_forward.1} parent=1 // pred_fallthru
      _
    // Predicated region
    $region26: #{classifier_v_forward.1} parent=1 // pred_check
      _
    $region27: #{classifier_v_forward.1} parent=1 // pred_check_branch
      %26 = sbr.rel (0) target = $region29
    $region28: #{classifier_v_forward.1} parent=1 // pred_region
      _
    $region29: #{classifier_v_forward.1} parent=1 // pred_fallthru
      _
    %v28 = vld [vmem:[%s0] sm:$0xff]
    %v29 = vld [vmem:[%s0 + $0x8] sm:$0xff]
    %v32 = vcombine.high %v28, %v28
    %v34 = vunpack.c.l.s4 1983009808
    %v35 = vunpack.c.0.s8 %v34
    %v36 = vlaneseq
    %v37 = vshrl.u32 %v36, 7
    %v38 = vsub.s32 %v35, %v37
    %v39 = vrot.slane %v28, %v38
    %v41 = vunpack.c.l.s4 1983009808
    %v42 = vunpack.c.0.s8 %v41
    %v43 = vlaneseq
    %v44 = vshrl.u32 %v43, 7
    %v45 = vsub.s32 %v42, %v44
    %v46 = vrot.slane %v32, %v45
    %v47 = vcombine.high %v39, %v39
    %v48 = vcombine.high %v46, %v46
    %v49 = vcombine.high %v29, %v29
    %v51 = vunpack.c.l.s4 1983009808
    %v52 = vunpack.c.0.s8 %v51
    %v53 = vlaneseq
    %v54 = vshrl.u32 %v53, 7
    %v55 = vsub.s32 %v52, %v54
    %v56 = vrot.slane %v29, %v55
    %v58 = vunpack.c.l.s4 1983009808
    %v59 = vunpack.c.0.s8 %v58
    %v60 = vlaneseq
    %v61 = vshrl.u32 %v60, 7
    %v62 = vsub.s32 %v59, %v61
    %v63 = vrot.slane %v49, %v62
    %v64 = vcombine.high %v56, %v56
    %v65 = vcombine.high %v63, %v63
    %v74 = vpack.c.bf16 %v39, %v39
    %v75 = vpack.c.bf16 %v47, %v47
    %v76 = vpack.c.bf16 %v46, %v46
    %v77 = vpack.c.bf16 %v48, %v48
    %v78 = vpack.c.bf16 %v56, %v56
    %v79 = vpack.c.bf16 %v64, %v64
    %v80 = vpack.c.bf16 %v63, %v63
    %v81 = vpack.c.bf16 %v65, %v65
    %v82 = vld [vmem:[%s1] sm:$0xff]
    %v83 = vld [vmem:[%s1 + $0x8] sm:$0xff]
    %v86 = vcombine.high %v82, %v82
    %v88 = vunpack.c.l.s4 1983009808
    %v89 = vunpack.c.0.s8 %v88
    %v90 = vlaneseq
    %v91 = vshrl.u32 %v90, 7
    %v92 = vsub.s32 %v89, %v91
    %v93 = vrot.slane %v82, %v92
    %v95 = vunpack.c.l.s4 1983009808
    %v96 = vunpack.c.0.s8 %v95
    %v97 = vlaneseq
    %v98 = vshrl.u32 %v97, 7
    %v99 = vsub.s32 %v96, %v98
    %v100 = vrot.slane %v86, %v99
    %v101 = vcombine.high %v93, %v93
    %v102 = vcombine.high %v100, %v100
    %v103 = vcombine.high %v83, %v83
    %v105 = vunpack.c.l.s4 1983009808
    %v106 = vunpack.c.0.s8 %v105
    %v107 = vlaneseq
    %v108 = vshrl.u32 %v107, 7
    %v109 = vsub.s32 %v106, %v108
    %v110 = vrot.slane %v83, %v109
    %v112 = vunpack.c.l.s4 1983009808
    %v113 = vunpack.c.0.s8 %v112
    %v114 = vlaneseq
    %v115 = vshrl.u32 %v114, 7
    %v116 = vsub.s32 %v113, %v115
    %v117 = vrot.slane %v103, %v116
    %v118 = vcombine.high %v110, %v110
    %v119 = vcombine.high %v117, %v117
    %v128 = vpack.c.bf16 %v93, %v93
    %v129 = vpack.c.bf16 %v101, %v101
    %v130 = vpack.c.bf16 %v100, %v100
    %v131 = vpack.c.bf16 %v102, %v102
    %v132 = vpack.c.bf16 %v110, %v110
    %v133 = vpack.c.bf16 %v118, %v118
    %v134 = vpack.c.bf16 %v117, %v117
    %v135 = vpack.c.bf16 %v119, %v119
    %v136 = vld [vmem:[%s2] sm:$0xf]
    %v137 = vld [vmem:[%s2 + $0x4] sm:$0xf]
    %v138 = vld [vmem:[%s2 + $0x8] sm:$0xf]
    %v139 = vld [vmem:[%s2 + $0xc] sm:$0xf]
    %v140 = vld [vmem:[%s2 + $0x10] sm:$0xf]
    %v141 = vld [vmem:[%s2 + $0x14] sm:$0xf]
    %v142 = vld [vmem:[%s2 + $0x18] sm:$0xf]
    %v143 = vld [vmem:[%s2 + $0x1c] sm:$0xf]
    %v144 = vld [vmem:[%s2 + $0x20] sm:$0xf]
    %v145 = vld [vmem:[%s2 + $0x24] sm:$0xf]
    %v146 = vld [vmem:[%s2 + $0x28] sm:$0xf]
    %v147 = vld [vmem:[%s2 + $0x2c] sm:$0xf]
    %v148 = vld [vmem:[%s2 + $0x30] sm:$0xf]
    %v149 = vld [vmem:[%s2 + $0x34] sm:$0xf]
    %v150 = vld [vmem:[%s2 + $0x38] sm:$0xf]
    %v151 = vld [vmem:[%s2 + $0x3c] sm:$0xf]
    %v152 = vld [vmem:[%s2 + $0x40] sm:$0xf]
    %v153 = vld [vmem:[%s2 + $0x44] sm:$0xf]
    %v154 = vld [vmem:[%s2 + $0x48] sm:$0xf]
    %v155 = vld [vmem:[%s2 + $0x4c] sm:$0xf]
    %v156 = vld [vmem:[%s2 + $0x50] sm:$0xf]
    %v157 = vld [vmem:[%s2 + $0x54] sm:$0xf]
    %v158 = vld [vmem:[%s2 + $0x58] sm:$0xf]
    %v159 = vld [vmem:[%s2 + $0x5c] sm:$0xf]
    %v160 = vld [vmem:[%s2 + $0x60] sm:$0xf]
    %v161 = vld [vmem:[%s2 + $0x64] sm:$0xf]
    %v162 = vld [vmem:[%s2 + $0x68] sm:$0xf]
    %v163 = vld [vmem:[%s2 + $0x6c] sm:$0xf]
    %v164 = vld [vmem:[%s2 + $0x70] sm:$0xf]
    %v165 = vld [vmem:[%s2 + $0x74] sm:$0xf]
    %v166 = vld [vmem:[%s2 + $0x78] sm:$0xf]
    %v167 = vld [vmem:[%s2 + $0x7c] sm:$0xf]
    %v168 = vld [vmem:[%s2 + $0x80] sm:$0xf]
    %v169 = vld [vmem:[%s2 + $0x84] sm:$0xf]
    %v170 = vld [vmem:[%s2 + $0x88] sm:$0xf]
    %v171 = vld [vmem:[%s2 + $0x8c] sm:$0xf]
    %v172 = vld [vmem:[%s2 + $0x90] sm:$0xf]
    %v173 = vld [vmem:[%s2 + $0x94] sm:$0xf]
    %v174 = vld [vmem:[%s2 + $0x98] sm:$0xf]
    %v175 = vld [vmem:[%s2 + $0x9c] sm:$0xf]
    %v176 = vld [vmem:[%s2 + $0xa0] sm:$0xf]
    %v177 = vld [vmem:[%s2 + $0xa4] sm:$0xf]
    %v178 = vld [vmem:[%s2 + $0xa8] sm:$0xf]
    %v179 = vld [vmem:[%s2 + $0xac] sm:$0xf]
    %v180 = vld [vmem:[%s2 + $0xb0] sm:$0xf]
    %v181 = vld [vmem:[%s2 + $0xb4] sm:$0xf]
    %v182 = vld [vmem:[%s2 + $0xb8] sm:$0xf]
    %v183 = vld [vmem:[%s2 + $0xbc] sm:$0xf]
    %v184 = vld [vmem:[%s2 + $0xc0] sm:$0xf]
    %v185 = vld [vmem:[%s2 + $0xc4] sm:$0xf]
    %v186 = vld [vmem:[%s2 + $0xc8] sm:$0xf]
    %v187 = vld [vmem:[%s2 + $0xcc] sm:$0xf]
    %v188 = vld [vmem:[%s2 + $0xd0] sm:$0xf]
    %v189 = vld [vmem:[%s2 + $0xd4] sm:$0xf]
    %v190 = vld [vmem:[%s2 + $0xd8] sm:$0xf]
    %v191 = vld [vmem:[%s2 + $0xdc] sm:$0xf]
    %v192 = vld [vmem:[%s2 + $0xe0] sm:$0xf]
    %v193 = vld [vmem:[%s2 + $0xe4] sm:$0xf]
    %v194 = vld [vmem:[%s2 + $0xe8] sm:$0xf]
    %v195 = vld [vmem:[%s2 + $0xec] sm:$0xf]
    %v196 = vld [vmem:[%s2 + $0xf0] sm:$0xf]
    %v197 = vld [vmem:[%s2 + $0xf4] sm:$0xf]
    %v198 = vld [vmem:[%s2 + $0xf8] sm:$0xf]
    %v199 = vld [vmem:[%s2 + $0xfc] sm:$0xf]
    %v200 = vld [vmem:[%s2 + $0x100] sm:$0xf]
    %v201 = vld [vmem:[%s2 + $0x104] sm:$0xf]
    %v202 = vld [vmem:[%s2 + $0x108] sm:$0xf]
    %v203 = vld [vmem:[%s2 + $0x10c] sm:$0xf]
    %v204 = vld [vmem:[%s2 + $0x110] sm:$0xf]
    %v205 = vld [vmem:[%s2 + $0x114] sm:$0xf]
    %v206 = vld [vmem:[%s2 + $0x118] sm:$0xf]
    %v207 = vld [vmem:[%s2 + $0x11c] sm:$0xf]
    %v208 = vld [vmem:[%s2 + $0x120] sm:$0xf]
    %v209 = vld [vmem:[%s2 + $0x124] sm:$0xf]
    %v210 = vld [vmem:[%s2 + $0x128] sm:$0xf]
    %v211 = vld [vmem:[%s2 + $0x12c] sm:$0xf]
    %v212 = vld [vmem:[%s2 + $0x130] sm:$0xf]
    %v213 = vld [vmem:[%s2 + $0x134] sm:$0xf]
    %v214 = vld [vmem:[%s2 + $0x138] sm:$0xf]
    %v215 = vld [vmem:[%s2 + $0x13c] sm:$0xf]
    %v216 = vld [vmem:[%s2 + $0x140] sm:$0xf]
    %v217 = vld [vmem:[%s2 + $0x144] sm:$0xf]
    %v218 = vld [vmem:[%s2 + $0x148] sm:$0xf]
    %v219 = vld [vmem:[%s2 + $0x14c] sm:$0xf]
    %v220 = vld [vmem:[%s2 + $0x150] sm:$0xf]
    %v221 = vld [vmem:[%s2 + $0x154] sm:$0xf]
    %v222 = vld [vmem:[%s2 + $0x158] sm:$0xf]
    %v223 = vld [vmem:[%s2 + $0x15c] sm:$0xf]
    %v224 = vld [vmem:[%s2 + $0x160] sm:$0xf]
    %v225 = vld [vmem:[%s2 + $0x164] sm:$0xf]
    %v226 = vld [vmem:[%s2 + $0x168] sm:$0xf]
    %v227 = vld [vmem:[%s2 + $0x16c] sm:$0xf]
    %v228 = vld [vmem:[%s2 + $0x170] sm:$0xf]
    %v229 = vld [vmem:[%s2 + $0x174] sm:$0xf]
    %v230 = vld [vmem:[%s2 + $0x178] sm:$0xf]
    %v231 = vld [vmem:[%s2 + $0x17c] sm:$0xf]
    %v232 = vld [vmem:[%s2 + $0x180] sm:$0xf]
    %v233 = vld [vmem:[%s2 + $0x184] sm:$0xf]
    %v234 = vld [vmem:[%s2 + $0x188] sm:$0xf]
    %v235 = vld [vmem:[%s2 + $0x18c] sm:$0xf]
    %v236 = vld [vmem:[%s2 + $0x190] sm:$0xf]
    %v237 = vld [vmem:[%s2 + $0x194] sm:$0xf]
    %v238 = vld [vmem:[%s2 + $0x198] sm:$0xf]
    %v239 = vld [vmem:[%s2 + $0x19c] sm:$0xf]
    %v240 = vld [vmem:[%s2 + $0x1a0] sm:$0xf]
    %v241 = vld [vmem:[%s2 + $0x1a4] sm:$0xf]
    %v242 = vld [vmem:[%s2 + $0x1a8] sm:$0xf]
    %v243 = vld [vmem:[%s2 + $0x1ac] sm:$0xf]
    %v244 = vld [vmem:[%s2 + $0x1b0] sm:$0xf]
    %v245 = vld [vmem:[%s2 + $0x1b4] sm:$0xf]
    %v246 = vld [vmem:[%s2 + $0x1b8] sm:$0xf]
    %v247 = vld [vmem:[%s2 + $0x1bc] sm:$0xf]
    %v248 = vld [vmem:[%s2 + $0x1c0] sm:$0xf]
    %v249 = vld [vmem:[%s2 + $0x1c4] sm:$0xf]
    %v250 = vld [vmem:[%s2 + $0x1c8] sm:$0xf]
    %v251 = vld [vmem:[%s2 + $0x1cc] sm:$0xf]
    %v252 = vld [vmem:[%s2 + $0x1d0] sm:$0xf]
    %v253 = vld [vmem:[%s2 + $0x1d4] sm:$0xf]
    %v254 = vld [vmem:[%s2 + $0x1d8] sm:$0xf]
    %v255 = vld [vmem:[%s2 + $0x1dc] sm:$0xf]
    %v256 = vld [vmem:[%s2 + $0x1e0] sm:$0xf]
    %v257 = vld [vmem:[%s2 + $0x1e4] sm:$0xf]
    %v258 = vld [vmem:[%s2 + $0x1e8] sm:$0xf]
    %v259 = vld [vmem:[%s2 + $0x1ec] sm:$0xf]
    %v260 = vld [vmem:[%s2 + $0x1f0] sm:$0xf]
    %v261 = vld [vmem:[%s2 + $0x1f4] sm:$0xf]
    %v262 = vld [vmem:[%s2 + $0x1f8] sm:$0xf]
    %v263 = vld [vmem:[%s2 + $0x1fc] sm:$0xf]
    %v264 = vld [vmem:[%s3] sm:$0xf]
    %v265 = vld [vmem:[%s3 + $0x4] sm:$0xf]
    %v266 = vld [vmem:[%s3 + $0x8] sm:$0xf]
    %v267 = vld [vmem:[%s3 + $0xc] sm:$0xf]
    %v268 = vld [vmem:[%s3 + $0x10] sm:$0xf]
    %v269 = vld [vmem:[%s3 + $0x14] sm:$0xf]
    %v270 = vld [vmem:[%s3 + $0x18] sm:$0xf]
    %v271 = vld [vmem:[%s3 + $0x1c] sm:$0xf]
    %v272 = vld [vmem:[%s3 + $0x20] sm:$0xf]
    %v273 = vld [vmem:[%s3 + $0x24] sm:$0xf]
    %v274 = vld [vmem:[%s3 + $0x28] sm:$0xf]
    %v275 = vld [vmem:[%s3 + $0x2c] sm:$0xf]
    %v276 = vld [vmem:[%s3 + $0x30] sm:$0xf]
    %v277 = vld [vmem:[%s3 + $0x34] sm:$0xf]
    %v278 = vld [vmem:[%s3 + $0x38] sm:$0xf]
    %v279 = vld [vmem:[%s3 + $0x3c] sm:$0xf]
    %v280 = vld [vmem:[%s3 + $0x40] sm:$0xf]
    %v281 = vld [vmem:[%s3 + $0x44] sm:$0xf]
    %v282 = vld [vmem:[%s3 + $0x48] sm:$0xf]
    %v283 = vld [vmem:[%s3 + $0x4c] sm:$0xf]
    %v284 = vld [vmem:[%s3 + $0x50] sm:$0xf]
    %v285 = vld [vmem:[%s3 + $0x54] sm:$0xf]
    %v286 = vld [vmem:[%s3 + $0x58] sm:$0xf]
    %v287 = vld [vmem:[%s3 + $0x5c] sm:$0xf]
    %v288 = vld [vmem:[%s3 + $0x60] sm:$0xf]
    %v289 = vld [vmem:[%s3 + $0x64] sm:$0xf]
    %v290 = vld [vmem:[%s3 + $0x68] sm:$0xf]
    %v291 = vld [vmem:[%s3 + $0x6c] sm:$0xf]
    %v292 = vld [vmem:[%s3 + $0x70] sm:$0xf]
    %v293 = vld [vmem:[%s3 + $0x74] sm:$0xf]
    %v294 = vld [vmem:[%s3 + $0x78] sm:$0xf]
    %v295 = vld [vmem:[%s3 + $0x7c] sm:$0xf]
    %v296 = vld [vmem:[%s3 + $0x80] sm:$0xf]
    %v297 = vld [vmem:[%s3 + $0x84] sm:$0xf]
    %v298 = vld [vmem:[%s3 + $0x88] sm:$0xf]
    %v299 = vld [vmem:[%s3 + $0x8c] sm:$0xf]
    %v300 = vld [vmem:[%s3 + $0x90] sm:$0xf]
    %v301 = vld [vmem:[%s3 + $0x94] sm:$0xf]
    %v302 = vld [vmem:[%s3 + $0x98] sm:$0xf]
    %v303 = vld [vmem:[%s3 + $0x9c] sm:$0xf]
    %v304 = vld [vmem:[%s3 + $0xa0] sm:$0xf]
    %v305 = vld [vmem:[%s3 + $0xa4] sm:$0xf]
    %v306 = vld [vmem:[%s3 + $0xa8] sm:$0xf]
    %v307 = vld [vmem:[%s3 + $0xac] sm:$0xf]
    %v308 = vld [vmem:[%s3 + $0xb0] sm:$0xf]
    %v309 = vld [vmem:[%s3 + $0xb4] sm:$0xf]
    %v310 = vld [vmem:[%s3 + $0xb8] sm:$0xf]
    %v311 = vld [vmem:[%s3 + $0xbc] sm:$0xf]
    %v312 = vld [vmem:[%s3 + $0xc0] sm:$0xf]
    %v313 = vld [vmem:[%s3 + $0xc4] sm:$0xf]
    %v314 = vld [vmem:[%s3 + $0xc8] sm:$0xf]
    %v315 = vld [vmem:[%s3 + $0xcc] sm:$0xf]
    %v316 = vld [vmem:[%s3 + $0xd0] sm:$0xf]
    %v317 = vld [vmem:[%s3 + $0xd4] sm:$0xf]
    %v318 = vld [vmem:[%s3 + $0xd8] sm:$0xf]
    %v319 = vld [vmem:[%s3 + $0xdc] sm:$0xf]
    %v320 = vld [vmem:[%s3 + $0xe0] sm:$0xf]
    %v321 = vld [vmem:[%s3 + $0xe4] sm:$0xf]
    %v322 = vld [vmem:[%s3 + $0xe8] sm:$0xf]
    %v323 = vld [vmem:[%s3 + $0xec] sm:$0xf]
    %v324 = vld [vmem:[%s3 + $0xf0] sm:$0xf]
    %v325 = vld [vmem:[%s3 + $0xf4] sm:$0xf]
    %v326 = vld [vmem:[%s3 + $0xf8] sm:$0xf]
    %v327 = vld [vmem:[%s3 + $0xfc] sm:$0xf]
    %v328 = vld [vmem:[%s3 + $0x100] sm:$0xf]
    %v329 = vld [vmem:[%s3 + $0x104] sm:$0xf]
    %v330 = vld [vmem:[%s3 + $0x108] sm:$0xf]
    %v331 = vld [vmem:[%s3 + $0x10c] sm:$0xf]
    %v332 = vld [vmem:[%s3 + $0x110] sm:$0xf]
    %v333 = vld [vmem:[%s3 + $0x114] sm:$0xf]
    %v334 = vld [vmem:[%s3 + $0x118] sm:$0xf]
    %v335 = vld [vmem:[%s3 + $0x11c] sm:$0xf]
    %v336 = vld [vmem:[%s3 + $0x120] sm:$0xf]
    %v337 = vld [vmem:[%s3 + $0x124] sm:$0xf]
    %v338 = vld [vmem:[%s3 + $0x128] sm:$0xf]
    %v339 = vld [vmem:[%s3 + $0x12c] sm:$0xf]
    %v340 = vld [vmem:[%s3 + $0x130] sm:$0xf]
    %v341 = vld [vmem:[%s3 + $0x134] sm:$0xf]
    %v342 = vld [vmem:[%s3 + $0x138] sm:$0xf]
    %v343 = vld [vmem:[%s3 + $0x13c] sm:$0xf]
    %v344 = vld [vmem:[%s3 + $0x140] sm:$0xf]
    %v345 = vld [vmem:[%s3 + $0x144] sm:$0xf]
    %v346 = vld [vmem:[%s3 + $0x148] sm:$0xf]
    %v347 = vld [vmem:[%s3 + $0x14c] sm:$0xf]
    %v348 = vld [vmem:[%s3 + $0x150] sm:$0xf]
    %v349 = vld [vmem:[%s3 + $0x154] sm:$0xf]
    %v350 = vld [vmem:[%s3 + $0x158] sm:$0xf]
    %v351 = vld [vmem:[%s3 + $0x15c] sm:$0xf]
    %v352 = vld [vmem:[%s3 + $0x160] sm:$0xf]
    %v353 = vld [vmem:[%s3 + $0x164] sm:$0xf]
    %v354 = vld [vmem:[%s3 + $0x168] sm:$0xf]
    %v355 = vld [vmem:[%s3 + $0x16c] sm:$0xf]
    %v356 = vld [vmem:[%s3 + $0x170] sm:$0xf]
    %v357 = vld [vmem:[%s3 + $0x174] sm:$0xf]
    %v358 = vld [vmem:[%s3 + $0x178] sm:$0xf]
    %v359 = vld [vmem:[%s3 + $0x17c] sm:$0xf]
    %v360 = vld [vmem:[%s3 + $0x180] sm:$0xf]
    %v361 = vld [vmem:[%s3 + $0x184] sm:$0xf]
    %v362 = vld [vmem:[%s3 + $0x188] sm:$0xf]
    %v363 = vld [vmem:[%s3 + $0x18c] sm:$0xf]
    %v364 = vld [vmem:[%s3 + $0x190] sm:$0xf]
    %v365 = vld [vmem:[%s3 + $0x194] sm:$0xf]
    %v366 = vld [vmem:[%s3 + $0x198] sm:$0xf]
    %v367 = vld [vmem:[%s3 + $0x19c] sm:$0xf]
    %v368 = vld [vmem:[%s3 + $0x1a0] sm:$0xf]
    %v369 = vld [vmem:[%s3 + $0x1a4] sm:$0xf]
    %v370 = vld [vmem:[%s3 + $0x1a8] sm:$0xf]
    %v371 = vld [vmem:[%s3 + $0x1ac] sm:$0xf]
    %v372 = vld [vmem:[%s3 + $0x1b0] sm:$0xf]
    %v373 = vld [vmem:[%s3 + $0x1b4] sm:$0xf]
    %v374 = vld [vmem:[%s3 + $0x1b8] sm:$0xf]
    %v375 = vld [vmem:[%s3 + $0x1bc] sm:$0xf]
    %v376 = vld [vmem:[%s3 + $0x1c0] sm:$0xf]
    %v377 = vld [vmem:[%s3 + $0x1c4] sm:$0xf]
    %v378 = vld [vmem:[%s3 + $0x1c8] sm:$0xf]
    %v379 = vld [vmem:[%s3 + $0x1cc] sm:$0xf]
    %v380 = vld [vmem:[%s3 + $0x1d0] sm:$0xf]
    %v381 = vld [vmem:[%s3 + $0x1d4] sm:$0xf]
    %v382 = vld [vmem:[%s3 + $0x1d8] sm:$0xf]
    %v383 = vld [vmem:[%s3 + $0x1dc] sm:$0xf]
    %v384 = vld [vmem:[%s3 + $0x1e0] sm:$0xf]
    %v385 = vld [vmem:[%s3 + $0x1e4] sm:$0xf]
    %v386 = vld [vmem:[%s3 + $0x1e8] sm:$0xf]
    %v387 = vld [vmem:[%s3 + $0x1ec] sm:$0xf]
    %v388 = vld [vmem:[%s3 + $0x1f0] sm:$0xf]
    %v389 = vld [vmem:[%s3 + $0x1f4] sm:$0xf]
    %v390 = vld [vmem:[%s3 + $0x1f8] sm:$0xf]
    %v391 = vld [vmem:[%s3 + $0x1fc] sm:$0xf]
    %v520 = vunpack.c.l.b16 %v264
    %v521 = vunpack.c.l.b16 %v265
    %v522 = vunpack.c.l.b16 %v266
    %v523 = vunpack.c.l.b16 %v267
    %v524 = vunpack.c.l.b16 %v268
    %v525 = vunpack.c.l.b16 %v269
    %v526 = vunpack.c.l.b16 %v270
    %v527 = vunpack.c.l.b16 %v271
    %v528 = vunpack.c.l.b16 %v272
    %v529 = vunpack.c.l.b16 %v273
    %v530 = vunpack.c.l.b16 %v274
    %v531 = vunpack.c.l.b16 %v275
    %v532 = vunpack.c.l.b16 %v276
    %v533 = vunpack.c.l.b16 %v277
    %v534 = vunpack.c.l.b16 %v278
    %v535 = vunpack.c.l.b16 %v279
    %v536 = vunpack.c.l.b16 %v280
    %v537 = vunpack.c.l.b16 %v281
    %v538 = vunpack.c.l.b16 %v282
    %v539 = vunpack.c.l.b16 %v283
    %v540 = vunpack.c.l.b16 %v284
    %v541 = vunpack.c.l.b16 %v285
    %v542 = vunpack.c.l.b16 %v286
    %v543 = vunpack.c.l.b16 %v287
    %v544 = vunpack.c.l.b16 %v288
    %v545 = vunpack.c.l.b16 %v289
    %v546 = vunpack.c.l.b16 %v290
    %v547 = vunpack.c.l.b16 %v291
    %v548 = vunpack.c.l.b16 %v292
    %v549 = vunpack.c.l.b16 %v293
    %v550 = vunpack.c.l.b16 %v294
    %v551 = vunpack.c.l.b16 %v295
    %v552 = vunpack.c.l.b16 %v296
    %v553 = vunpack.c.l.b16 %v297
    %v554 = vunpack.c.l.b16 %v298
    %v555 = vunpack.c.l.b16 %v299
    %v556 = vunpack.c.l.b16 %v300
    %v557 = vunpack.c.l.b16 %v301
    %v558 = vunpack.c.l.b16 %v302
    %v559 = vunpack.c.l.b16 %v303
    %v560 = vunpack.c.l.b16 %v304
    %v561 = vunpack.c.l.b16 %v305
    %v562 = vunpack.c.l.b16 %v306
    %v563 = vunpack.c.l.b16 %v307
    %v564 = vunpack.c.l.b16 %v308
    %v565 = vunpack.c.l.b16 %v309
    %v566 = vunpack.c.l.b16 %v310
    %v567 = vunpack.c.l.b16 %v311
    %v568 = vunpack.c.l.b16 %v312
    %v569 = vunpack.c.l.b16 %v313
    %v570 = vunpack.c.l.b16 %v314
    %v571 = vunpack.c.l.b16 %v315
    %v572 = vunpack.c.l.b16 %v316
    %v573 = vunpack.c.l.b16 %v317
    %v574 = vunpack.c.l.b16 %v318
    %v575 = vunpack.c.l.b16 %v319
    %v576 = vunpack.c.l.b16 %v320
    %v577 = vunpack.c.l.b16 %v321
    %v578 = vunpack.c.l.b16 %v322
    %v579 = vunpack.c.l.b16 %v323
    %v580 = vunpack.c.l.b16 %v324
    %v581 = vunpack.c.l.b16 %v325
    %v582 = vunpack.c.l.b16 %v326
    %v583 = vunpack.c.l.b16 %v327
    %v584 = vunpack.c.l.b16 %v328
    %v585 = vunpack.c.l.b16 %v329
    %v586 = vunpack.c.l.b16 %v330
    %v587 = vunpack.c.l.b16 %v331
    %v588 = vunpack.c.l.b16 %v332
    %v589 = vunpack.c.l.b16 %v333
    %v590 = vunpack.c.l.b16 %v334
    %v591 = vunpack.c.l.b16 %v335
    %v592 = vunpack.c.l.b16 %v336
    %v593 = vunpack.c.l.b16 %v337
    %v594 = vunpack.c.l.b16 %v338
    %v595 = vunpack.c.l.b16 %v339
    %v596 = vunpack.c.l.b16 %v340
    %v597 = vunpack.c.l.b16 %v341
    %v598 = vunpack.c.l.b16 %v342
    %v599 = vunpack.c.l.b16 %v343
    %v600 = vunpack.c.l.b16 %v344
    %v601 = vunpack.c.l.b16 %v345
    %v602 = vunpack.c.l.b16 %v346
    %v603 = vunpack.c.l.b16 %v347
    %v604 = vunpack.c.l.b16 %v348
    %v605 = vunpack.c.l.b16 %v349
    %v606 = vunpack.c.l.b16 %v350
    %v607 = vunpack.c.l.b16 %v351
    %v608 = vunpack.c.l.b16 %v352
    %v609 = vunpack.c.l.b16 %v353
    %v610 = vunpack.c.l.b16 %v354
    %v611 = vunpack.c.l.b16 %v355
    %v612 = vunpack.c.l.b16 %v356
    %v613 = vunpack.c.l.b16 %v357
    %v614 = vunpack.c.l.b16 %v358
    %v615 = vunpack.c.l.b16 %v359
    %v616 = vunpack.c.l.b16 %v360
    %v617 = vunpack.c.l.b16 %v361
    %v618 = vunpack.c.l.b16 %v362
    %v619 = vunpack.c.l.b16 %v363
    %v620 = vunpack.c.l.b16 %v364
    %v621 = vunpack.c.l.b16 %v365
    %v622 = vunpack.c.l.b16 %v366
    %v623 = vunpack.c.l.b16 %v367
    %v624 = vunpack.c.l.b16 %v368
    %v625 = vunpack.c.l.b16 %v369
    %v626 = vunpack.c.l.b16 %v370
    %v627 = vunpack.c.l.b16 %v371
    %v628 = vunpack.c.l.b16 %v372
    %v629 = vunpack.c.l.b16 %v373
    %v630 = vunpack.c.l.b16 %v374
    %v631 = vunpack.c.l.b16 %v375
    %v632 = vunpack.c.l.b16 %v376
    %v633 = vunpack.c.l.b16 %v377
    %v634 = vunpack.c.l.b16 %v378
    %v635 = vunpack.c.l.b16 %v379
    %v636 = vunpack.c.l.b16 %v380
    %v637 = vunpack.c.l.b16 %v381
    %v638 = vunpack.c.l.b16 %v382
    %v639 = vunpack.c.l.b16 %v383
    %v640 = vunpack.c.l.b16 %v384
    %v641 = vunpack.c.l.b16 %v385
    %v642 = vunpack.c.l.b16 %v386
    %v643 = vunpack.c.l.b16 %v387
    %v644 = vunpack.c.l.b16 %v388
    %v645 = vunpack.c.l.b16 %v389
    %v646 = vunpack.c.l.b16 %v390
    %v647 = vunpack.c.l.b16 %v391
    %v648 = vpack.c.b16 %v521, %v520
    %v649 = vpack.c.b16 %v523, %v522
    %v650 = vpack.c.b16 %v525, %v524
    %v651 = vpack.c.b16 %v527, %v526
    %v652 = vpack.c.b16 %v529, %v528
    %v653 = vpack.c.b16 %v531, %v530
    %v654 = vpack.c.b16 %v533, %v532
    %v655 = vpack.c.b16 %v535, %v534
    %v656 = vpack.c.b16 %v537, %v536
    %v657 = vpack.c.b16 %v539, %v538
    %v658 = vpack.c.b16 %v541, %v540
    %v659 = vpack.c.b16 %v543, %v542
    %v660 = vpack.c.b16 %v545, %v544
    %v661 = vpack.c.b16 %v547, %v546
    %v662 = vpack.c.b16 %v549, %v548
    %v663 = vpack.c.b16 %v551, %v550
    %v664 = vpack.c.b16 %v553, %v552
    %v665 = vpack.c.b16 %v555, %v554
    %v666 = vpack.c.b16 %v557, %v556
    %v667 = vpack.c.b16 %v559, %v558
    %v668 = vpack.c.b16 %v561, %v560
    %v669 = vpack.c.b16 %v563, %v562
    %v670 = vpack.c.b16 %v565, %v564
    %v671 = vpack.c.b16 %v567, %v566
    %v672 = vpack.c.b16 %v569, %v568
    %v673 = vpack.c.b16 %v571, %v570
    %v674 = vpack.c.b16 %v573, %v572
    %v675 = vpack.c.b16 %v575, %v574
    %v676 = vpack.c.b16 %v577, %v576
    %v677 = vpack.c.b16 %v579, %v578
    %v678 = vpack.c.b16 %v581, %v580
    %v679 = vpack.c.b16 %v583, %v582
    %v680 = vpack.c.b16 %v585, %v584
    %v681 = vpack.c.b16 %v587, %v586
    %v682 = vpack.c.b16 %v589, %v588
    %v683 = vpack.c.b16 %v591, %v590
    %v684 = vpack.c.b16 %v593, %v592
    %v685 = vpack.c.b16 %v595, %v594
    %v686 = vpack.c.b16 %v597, %v596
    %v687 = vpack.c.b16 %v599, %v598
    %v688 = vpack.c.b16 %v601, %v600
    %v689 = vpack.c.b16 %v603, %v602
    %v690 = vpack.c.b16 %v605, %v604
    %v691 = vpack.c.b16 %v607, %v606
    %v692 = vpack.c.b16 %v609, %v608
    %v693 = vpack.c.b16 %v611, %v610
    %v694 = vpack.c.b16 %v613, %v612
    %v695 = vpack.c.b16 %v615, %v614
    %v696 = vpack.c.b16 %v617, %v616
    %v697 = vpack.c.b16 %v619, %v618
    %v698 = vpack.c.b16 %v621, %v620
    %v699 = vpack.c.b16 %v623, %v622
    %v700 = vpack.c.b16 %v625, %v624
    %v701 = vpack.c.b16 %v627, %v626
    %v702 = vpack.c.b16 %v629, %v628
    %v703 = vpack.c.b16 %v631, %v630
    %v704 = vpack.c.b16 %v633, %v632
    %v705 = vpack.c.b16 %v635, %v634
    %v706 = vpack.c.b16 %v637, %v636
    %v707 = vpack.c.b16 %v639, %v638
    %v708 = vpack.c.b16 %v641, %v640
    %v709 = vpack.c.b16 %v643, %v642
    %v710 = vpack.c.b16 %v645, %v644
    %v711 = vpack.c.b16 %v647, %v646
    %776 = vmatprep.subr.bf16.mxu0 0
    %777 = vmatpush1.bf16.msra.mxu0 %v648
    %778 = vmatprep.subr.bf16.mxu0 0
    %779 = vmatpush1.bf16.msra.mxu0 %v649
    %780 = vmatprep.subr.bf16.mxu0 0
    %781 = vmatpush1.bf16.msra.mxu0 %v650
    %782 = vmatprep.subr.bf16.mxu0 0
    %783 = vmatpush1.bf16.msra.mxu0 %v651
    %784 = vmatprep.subr.bf16.mxu0 0
    %785 = vmatpush1.bf16.msra.mxu0 %v652
    %786 = vmatprep.subr.bf16.mxu0 0
    %787 = vmatpush1.bf16.msra.mxu0 %v653
    %788 = vmatprep.subr.bf16.mxu0 0
    %789 = vmatpush1.bf16.msra.mxu0 %v654
    %790 = vmatprep.subr.bf16.mxu0 0
    %791 = vmatpush1.bf16.msra.mxu0 %v655
    %792 = vmatprep.subr.bf16.mxu0 0
    %793 = vmatpush1.bf16.msra.mxu0 %v656
    %794 = vmatprep.subr.bf16.mxu0 0
    %795 = vmatpush1.bf16.msra.mxu0 %v657
    %796 = vmatprep.subr.bf16.mxu0 0
    %797 = vmatpush1.bf16.msra.mxu0 %v658
    %798 = vmatprep.subr.bf16.mxu0 0
    %799 = vmatpush1.bf16.msra.mxu0 %v659
    %800 = vmatprep.subr.bf16.mxu0 0
    %801 = vmatpush1.bf16.msra.mxu0 %v660
    %802 = vmatprep.subr.bf16.mxu0 0
    %803 = vmatpush1.bf16.msra.mxu0 %v661
    %804 = vmatprep.subr.bf16.mxu0 0
    %805 = vmatpush1.bf16.msra.mxu0 %v662
    %806 = vmatprep.subr.bf16.mxu0 0
    %807 = vmatpush1.bf16.msra.mxu0 %v663
    %808 = vmatprep.mubr.bf16.mxu0 %v129
    %809 = vmatmul.mubr.bf16.gmra.mrb[0].mxu0 %v128
    %v810 = vpop.f32.mrb[0].mxu0
    %v811 = vadd.f32 0.0, %v810
    %v812 = vpop.f32.mrb[0].mxu0
    %v813 = vpop.f32.mrb[0].mxu0
    %v814 = vpop.f32.mrb[0].mxu0
    %815 = vdwg.mxu0
    %816 = vmatprep.subr.bf16.mxu0 0
    %817 = vmatpush1.bf16.msra.mxu0 %v664
    %818 = vmatprep.subr.bf16.mxu0 0
    %819 = vmatpush1.bf16.msra.mxu0 %v665
    %820 = vmatprep.subr.bf16.mxu0 0
    %821 = vmatpush1.bf16.msra.mxu0 %v666
    %822 = vmatprep.subr.bf16.mxu0 0
    %823 = vmatpush1.bf16.msra.mxu0 %v667
    %824 = vmatprep.subr.bf16.mxu0 0
    %825 = vmatpush1.bf16.msra.mxu0 %v668
    %826 = vmatprep.subr.bf16.mxu0 0
    %827 = vmatpush1.bf16.msra.mxu0 %v669
    %828 = vmatprep.subr.bf16.mxu0 0
    %829 = vmatpush1.bf16.msra.mxu0 %v670
    %830 = vmatprep.subr.bf16.mxu0 0
    %831 = vmatpush1.bf16.msra.mxu0 %v671
    %832 = vmatprep.subr.bf16.mxu0 0
    %833 = vmatpush1.bf16.msra.mxu0 %v672
    %834 = vmatprep.subr.bf16.mxu0 0
    %835 = vmatpush1.bf16.msra.mxu0 %v673
    %836 = vmatprep.subr.bf16.mxu0 0
    %837 = vmatpush1.bf16.msra.mxu0 %v674
    %838 = vmatprep.subr.bf16.mxu0 0
    %839 = vmatpush1.bf16.msra.mxu0 %v675
    %840 = vmatprep.subr.bf16.mxu0 0
    %841 = vmatpush1.bf16.msra.mxu0 %v676
    %842 = vmatprep.subr.bf16.mxu0 0
    %843 = vmatpush1.bf16.msra.mxu0 %v677
    %844 = vmatprep.subr.bf16.mxu0 0
    %845 = vmatpush1.bf16.msra.mxu0 %v678
    %846 = vmatprep.subr.bf16.mxu0 0
    %847 = vmatpush1.bf16.msra.mxu0 %v679
    %848 = vmatprep.mubr.bf16.mxu0 %v131
    %849 = vmatmul.mubr.bf16.gmra.mrb[0].mxu0 %v130
    %v850 = vpop.f32.mrb[0].mxu0
    %v851 = vadd.f32 %v811, %v850
    %v852 = vpop.f32.mrb[0].mxu0
    %v853 = vpop.f32.mrb[0].mxu0
    %v854 = vpop.f32.mrb[0].mxu0
    %855 = vdwg.mxu0
    %856 = vmatprep.subr.bf16.mxu0 0
    %857 = vmatpush1.bf16.msra.mxu0 %v680
    %858 = vmatprep.subr.bf16.mxu0 0
    %859 = vmatpush1.bf16.msra.mxu0 %v681
    %860 = vmatprep.subr.bf16.mxu0 0
    %861 = vmatpush1.bf16.msra.mxu0 %v682
    %862 = vmatprep.subr.bf16.mxu0 0
    %863 = vmatpush1.bf16.msra.mxu0 %v683
    %864 = vmatprep.subr.bf16.mxu0 0
    %865 = vmatpush1.bf16.msra.mxu0 %v684
    %866 = vmatprep.subr.bf16.mxu0 0
    %867 = vmatpush1.bf16.msra.mxu0 %v685
    %868 = vmatprep.subr.bf16.mxu0 0
    %869 = vmatpush1.bf16.msra.mxu0 %v686
    %870 = vmatprep.subr.bf16.mxu0 0
    %871 = vmatpush1.bf16.msra.mxu0 %v687
    %872 = vmatprep.subr.bf16.mxu0 0
    %873 = vmatpush1.bf16.msra.mxu0 %v688
    %874 = vmatprep.subr.bf16.mxu0 0
    %875 = vmatpush1.bf16.msra.mxu0 %v689
    %876 = vmatprep.subr.bf16.mxu0 0
    %877 = vmatpush1.bf16.msra.mxu0 %v690
    %878 = vmatprep.subr.bf16.mxu0 0
    %879 = vmatpush1.bf16.msra.mxu0 %v691
    %880 = vmatprep.subr.bf16.mxu0 0
    %881 = vmatpush1.bf16.msra.mxu0 %v692
    %882 = vmatprep.subr.bf16.mxu0 0
    %883 = vmatpush1.bf16.msra.mxu0 %v693
    %884 = vmatprep.subr.bf16.mxu0 0
    %885 = vmatpush1.bf16.msra.mxu0 %v694
    %886 = vmatprep.subr.bf16.mxu0 0
    %887 = vmatpush1.bf16.msra.mxu0 %v695
    %888 = vmatprep.mubr.bf16.mxu0 %v133
    %889 = vmatmul.mubr.bf16.gmra.mrb[0].mxu0 %v132
    %v890 = vpop.f32.mrb[0].mxu0
    %v891 = vadd.f32 %v851, %v890
    %v892 = vpop.f32.mrb[0].mxu0
    %v893 = vpop.f32.mrb[0].mxu0
    %v894 = vpop.f32.mrb[0].mxu0
    %895 = vdwg.mxu0
    %896 = vmatprep.subr.bf16.mxu0 0
    %897 = vmatpush1.bf16.msra.mxu0 %v696
    %898 = vmatprep.subr.bf16.mxu0 0
    %899 = vmatpush1.bf16.msra.mxu0 %v697
    %900 = vmatprep.subr.bf16.mxu0 0
    %901 = vmatpush1.bf16.msra.mxu0 %v698
    %902 = vmatprep.subr.bf16.mxu0 0
    %903 = vmatpush1.bf16.msra.mxu0 %v699
    %904 = vmatprep.subr.bf16.mxu0 0
    %905 = vmatpush1.bf16.msra.mxu0 %v700
    %906 = vmatprep.subr.bf16.mxu0 0
    %907 = vmatpush1.bf16.msra.mxu0 %v701
    %908 = vmatprep.subr.bf16.mxu0 0
    %909 = vmatpush1.bf16.msra.mxu0 %v702
    %910 = vmatprep.subr.bf16.mxu0 0
    %911 = vmatpush1.bf16.msra.mxu0 %v703
    %912 = vmatprep.subr.bf16.mxu0 0
    %913 = vmatpush1.bf16.msra.mxu0 %v704
    %914 = vmatprep.subr.bf16.mxu0 0
    %915 = vmatpush1.bf16.msra.mxu0 %v705
    %916 = vmatprep.subr.bf16.mxu0 0
    %917 = vmatpush1.bf16.msra.mxu0 %v706
    %918 = vmatprep.subr.bf16.mxu0 0
    %919 = vmatpush1.bf16.msra.mxu0 %v707
    %920 = vmatprep.subr.bf16.mxu0 0
    %921 = vmatpush1.bf16.msra.mxu0 %v708
    %922 = vmatprep.subr.bf16.mxu0 0
    %923 = vmatpush1.bf16.msra.mxu0 %v709
    %924 = vmatprep.subr.bf16.mxu0 0
    %925 = vmatpush1.bf16.msra.mxu0 %v710
    %926 = vmatprep.subr.bf16.mxu0 0
    %927 = vmatpush1.bf16.msra.mxu0 %v711
    %928 = vmatprep.mubr.bf16.mxu0 %v135
    %929 = vmatmul.mubr.bf16.gmra.mrb[0].mxu0 %v134
    %v930 = vpop.f32.mrb[0].mxu0
    %v931 = vadd.f32 %v891, %v930
    %v932 = vpop.f32.mrb[0].mxu0
    %v933 = vpop.f32.mrb[0].mxu0
    %v934 = vpop.f32.mrb[0].mxu0
    %935 = vdwg.mxu0
    %v1064 = vunpack.c.l.b16 %v136
    %v1065 = vunpack.c.l.b16 %v137
    %v1066 = vunpack.c.l.b16 %v138
    %v1067 = vunpack.c.l.b16 %v139
    %v1068 = vunpack.c.l.b16 %v140
    %v1069 = vunpack.c.l.b16 %v141
    %v1070 = vunpack.c.l.b16 %v142
    %v1071 = vunpack.c.l.b16 %v143
    %v1072 = vunpack.c.l.b16 %v144
    %v1073 = vunpack.c.l.b16 %v145
    %v1074 = vunpack.c.l.b16 %v146
    %v1075 = vunpack.c.l.b16 %v147
    %v1076 = vunpack.c.l.b16 %v148
    %v1077 = vunpack.c.l.b16 %v149
    %v1078 = vunpack.c.l.b16 %v150
    %v1079 = vunpack.c.l.b16 %v151
    %v1080 = vunpack.c.l.b16 %v152
    %v1081 = vunpack.c.l.b16 %v153
    %v1082 = vunpack.c.l.b16 %v154
    %v1083 = vunpack.c.l.b16 %v155
    %v1084 = vunpack.c.l.b16 %v156
    %v1085 = vunpack.c.l.b16 %v157
    %v1086 = vunpack.c.l.b16 %v158
    %v1087 = vunpack.c.l.b16 %v159
    %v1088 = vunpack.c.l.b16 %v160
    %v1089 = vunpack.c.l.b16 %v161
    %v1090 = vunpack.c.l.b16 %v162
    %v1091 = vunpack.c.l.b16 %v163
    %v1092 = vunpack.c.l.b16 %v164
    %v1093 = vunpack.c.l.b16 %v165
    %v1094 = vunpack.c.l.b16 %v166
    %v1095 = vunpack.c.l.b16 %v167
    %v1096 = vunpack.c.l.b16 %v168
    %v1097 = vunpack.c.l.b16 %v169
    %v1098 = vunpack.c.l.b16 %v170
    %v1099 = vunpack.c.l.b16 %v171
    %v1100 = vunpack.c.l.b16 %v172
    %v1101 = vunpack.c.l.b16 %v173
    %v1102 = vunpack.c.l.b16 %v174
    %v1103 = vunpack.c.l.b16 %v175
    %v1104 = vunpack.c.l.b16 %v176
    %v1105 = vunpack.c.l.b16 %v177
    %v1106 = vunpack.c.l.b16 %v178
    %v1107 = vunpack.c.l.b16 %v179
    %v1108 = vunpack.c.l.b16 %v180
    %v1109 = vunpack.c.l.b16 %v181
    %v1110 = vunpack.c.l.b16 %v182
    %v1111 = vunpack.c.l.b16 %v183
    %v1112 = vunpack.c.l.b16 %v184
    %v1113 = vunpack.c.l.b16 %v185
    %v1114 = vunpack.c.l.b16 %v186
    %v1115 = vunpack.c.l.b16 %v187
    %v1116 = vunpack.c.l.b16 %v188
    %v1117 = vunpack.c.l.b16 %v189
    %v1118 = vunpack.c.l.b16 %v190
    %v1119 = vunpack.c.l.b16 %v191
    %v1120 = vunpack.c.l.b16 %v192
    %v1121 = vunpack.c.l.b16 %v193
    %v1122 = vunpack.c.l.b16 %v194
    %v1123 = vunpack.c.l.b16 %v195
    %v1124 = vunpack.c.l.b16 %v196
    %v1125 = vunpack.c.l.b16 %v197
    %v1126 = vunpack.c.l.b16 %v198
    %v1127 = vunpack.c.l.b16 %v199
    %v1128 = vunpack.c.l.b16 %v200
    %v1129 = vunpack.c.l.b16 %v201
    %v1130 = vunpack.c.l.b16 %v202
    %v1131 = vunpack.c.l.b16 %v203
    %v1132 = vunpack.c.l.b16 %v204
    %v1133 = vunpack.c.l.b16 %v205
    %v1134 = vunpack.c.l.b16 %v206
    %v1135 = vunpack.c.l.b16 %v207
    %v1136 = vunpack.c.l.b16 %v208
    %v1137 = vunpack.c.l.b16 %v209
    %v1138 = vunpack.c.l.b16 %v210
    %v1139 = vunpack.c.l.b16 %v211
    %v1140 = vunpack.c.l.b16 %v212
    %v1141 = vunpack.c.l.b16 %v213
    %v1142 = vunpack.c.l.b16 %v214
    %v1143 = vunpack.c.l.b16 %v215
    %v1144 = vunpack.c.l.b16 %v216
    %v1145 = vunpack.c.l.b16 %v217
    %v1146 = vunpack.c.l.b16 %v218
    %v1147 = vunpack.c.l.b16 %v219
    %v1148 = vunpack.c.l.b16 %v220
    %v1149 = vunpack.c.l.b16 %v221
    %v1150 = vunpack.c.l.b16 %v222
    %v1151 = vunpack.c.l.b16 %v223
    %v1152 = vunpack.c.l.b16 %v224
    %v1153 = vunpack.c.l.b16 %v225
    %v1154 = vunpack.c.l.b16 %v226
    %v1155 = vunpack.c.l.b16 %v227
    %v1156 = vunpack.c.l.b16 %v228
    %v1157 = vunpack.c.l.b16 %v229
    %v1158 = vunpack.c.l.b16 %v230
    %v1159 = vunpack.c.l.b16 %v231
    %v1160 = vunpack.c.l.b16 %v232
    %v1161 = vunpack.c.l.b16 %v233
    %v1162 = vunpack.c.l.b16 %v234
    %v1163 = vunpack.c.l.b16 %v235
    %v1164 = vunpack.c.l.b16 %v236
    %v1165 = vunpack.c.l.b16 %v237
    %v1166 = vunpack.c.l.b16 %v238
    %v1167 = vunpack.c.l.b16 %v239
    %v1168 = vunpack.c.l.b16 %v240
    %v1169 = vunpack.c.l.b16 %v241
    %v1170 = vunpack.c.l.b16 %v242
    %v1171 = vunpack.c.l.b16 %v243
    %v1172 = vunpack.c.l.b16 %v244
    %v1173 = vunpack.c.l.b16 %v245
    %v1174 = vunpack.c.l.b16 %v246
    %v1175 = vunpack.c.l.b16 %v247
    %v1176 = vunpack.c.l.b16 %v248
    %v1177 = vunpack.c.l.b16 %v249
    %v1178 = vunpack.c.l.b16 %v250
    %v1179 = vunpack.c.l.b16 %v251
    %v1180 = vunpack.c.l.b16 %v252
    %v1181 = vunpack.c.l.b16 %v253
    %v1182 = vunpack.c.l.b16 %v254
    %v1183 = vunpack.c.l.b16 %v255
    %v1184 = vunpack.c.l.b16 %v256
    %v1185 = vunpack.c.l.b16 %v257
    %v1186 = vunpack.c.l.b16 %v258
    %v1187 = vunpack.c.l.b16 %v259
    %v1188 = vunpack.c.l.b16 %v260
    %v1189 = vunpack.c.l.b16 %v261
    %v1190 = vunpack.c.l.b16 %v262
    %v1191 = vunpack.c.l.b16 %v263
    %v1192 = vpack.c.b16 %v1065, %v1064
    %v1193 = vpack.c.b16 %v1067, %v1066
    %v1194 = vpack.c.b16 %v1069, %v1068
    %v1195 = vpack.c.b16 %v1071, %v1070
    %v1196 = vpack.c.b16 %v1073, %v1072
    %v1197 = vpack.c.b16 %v1075, %v1074
    %v1198 = vpack.c.b16 %v1077, %v1076
    %v1199 = vpack.c.b16 %v1079, %v1078
    %v1200 = vpack.c.b16 %v1081, %v1080
    %v1201 = vpack.c.b16 %v1083, %v1082
    %v1202 = vpack.c.b16 %v1085, %v1084
    %v1203 = vpack.c.b16 %v1087, %v1086
    %v1204 = vpack.c.b16 %v1089, %v1088
    %v1205 = vpack.c.b16 %v1091, %v1090
    %v1206 = vpack.c.b16 %v1093, %v1092
    %v1207 = vpack.c.b16 %v1095, %v1094
    %v1208 = vpack.c.b16 %v1097, %v1096
    %v1209 = vpack.c.b16 %v1099, %v1098
    %v1210 = vpack.c.b16 %v1101, %v1100
    %v1211 = vpack.c.b16 %v1103, %v1102
    %v1212 = vpack.c.b16 %v1105, %v1104
    %v1213 = vpack.c.b16 %v1107, %v1106
    %v1214 = vpack.c.b16 %v1109, %v1108
    %v1215 = vpack.c.b16 %v1111, %v1110
    %v1216 = vpack.c.b16 %v1113, %v1112
    %v1217 = vpack.c.b16 %v1115, %v1114
    %v1218 = vpack.c.b16 %v1117, %v1116
    %v1219 = vpack.c.b16 %v1119, %v1118
    %v1220 = vpack.c.b16 %v1121, %v1120
    %v1221 = vpack.c.b16 %v1123, %v1122
    %v1222 = vpack.c.b16 %v1125, %v1124
    %v1223 = vpack.c.b16 %v1127, %v1126
    %v1224 = vpack.c.b16 %v1129, %v1128
    %v1225 = vpack.c.b16 %v1131, %v1130
    %v1226 = vpack.c.b16 %v1133, %v1132
    %v1227 = vpack.c.b16 %v1135, %v1134
    %v1228 = vpack.c.b16 %v1137, %v1136
    %v1229 = vpack.c.b16 %v1139, %v1138
    %v1230 = vpack.c.b16 %v1141, %v1140
    %v1231 = vpack.c.b16 %v1143, %v1142
    %v1232 = vpack.c.b16 %v1145, %v1144
    %v1233 = vpack.c.b16 %v1147, %v1146
    %v1234 = vpack.c.b16 %v1149, %v1148
    %v1235 = vpack.c.b16 %v1151, %v1150
    %v1236 = vpack.c.b16 %v1153, %v1152
    %v1237 = vpack.c.b16 %v1155, %v1154
    %v1238 = vpack.c.b16 %v1157, %v1156
    %v1239 = vpack.c.b16 %v1159, %v1158
    %v1240 = vpack.c.b16 %v1161, %v1160
    %v1241 = vpack.c.b16 %v1163, %v1162
    %v1242 = vpack.c.b16 %v1165, %v1164
    %v1243 = vpack.c.b16 %v1167, %v1166
    %v1244 = vpack.c.b16 %v1169, %v1168
    %v1245 = vpack.c.b16 %v1171, %v1170
    %v1246 = vpack.c.b16 %v1173, %v1172
    %v1247 = vpack.c.b16 %v1175, %v1174
    %v1248 = vpack.c.b16 %v1177, %v1176
    %v1249 = vpack.c.b16 %v1179, %v1178
    %v1250 = vpack.c.b16 %v1181, %v1180
    %v1251 = vpack.c.b16 %v1183, %v1182
    %v1252 = vpack.c.b16 %v1185, %v1184
    %v1253 = vpack.c.b16 %v1187, %v1186
    %v1254 = vpack.c.b16 %v1189, %v1188
    %v1255 = vpack.c.b16 %v1191, %v1190
    %1320 = vmatprep.subr.bf16.mxu0 0
    %1321 = vmatpush1.bf16.msra.mxu0 %v1192
    %1322 = vmatprep.subr.bf16.mxu0 0
    %1323 = vmatpush1.bf16.msra.mxu0 %v1193
    %1324 = vmatprep.subr.bf16.mxu0 0
    %1325 = vmatpush1.bf16.msra.mxu0 %v1194
    %1326 = vmatprep.subr.bf16.mxu0 0
    %1327 = vmatpush1.bf16.msra.mxu0 %v1195
    %1328 = vmatprep.subr.bf16.mxu0 0
    %1329 = vmatpush1.bf16.msra.mxu0 %v1196
    %1330 = vmatprep.subr.bf16.mxu0 0
    %1331 = vmatpush1.bf16.msra.mxu0 %v1197
    %1332 = vmatprep.subr.bf16.mxu0 0
    %1333 = vmatpush1.bf16.msra.mxu0 %v1198
    %1334 = vmatprep.subr.bf16.mxu0 0
    %1335 = vmatpush1.bf16.msra.mxu0 %v1199
    %1336 = vmatprep.subr.bf16.mxu0 0
    %1337 = vmatpush1.bf16.msra.mxu0 %v1200
    %1338 = vmatprep.subr.bf16.mxu0 0
    %1339 = vmatpush1.bf16.msra.mxu0 %v1201
    %1340 = vmatprep.subr.bf16.mxu0 0
    %1341 = vmatpush1.bf16.msra.mxu0 %v1202
    %1342 = vmatprep.subr.bf16.mxu0 0
    %1343 = vmatpush1.bf16.msra.mxu0 %v1203
    %1344 = vmatprep.subr.bf16.mxu0 0
    %1345 = vmatpush1.bf16.msra.mxu0 %v1204
    %1346 = vmatprep.subr.bf16.mxu0 0
    %1347 = vmatpush1.bf16.msra.mxu0 %v1205
    %1348 = vmatprep.subr.bf16.mxu0 0
    %1349 = vmatpush1.bf16.msra.mxu0 %v1206
    %1350 = vmatprep.subr.bf16.mxu0 0
    %1351 = vmatpush1.bf16.msra.mxu0 %v1207
    %1352 = vmatprep.mubr.bf16.mxu0 %v75
    %1353 = vmatmul.mubr.bf16.gmra.mrb[0].mxu0 %v74
    %v1354 = vpop.f32.mrb[0].mxu0
    %v1355 = vadd.f32 %v931, %v1354
    %v1356 = vpop.f32.mrb[0].mxu0
    %v1357 = vpop.f32.mrb[0].mxu0
    %v1358 = vpop.f32.mrb[0].mxu0
    %1359 = vdwg.mxu0
    %1360 = vmatprep.subr.bf16.mxu0 0
    %1361 = vmatpush1.bf16.msra.mxu0 %v1208
    %1362 = vmatprep.subr.bf16.mxu0 0
    %1363 = vmatpush1.bf16.msra.mxu0 %v1209
    %1364 = vmatprep.subr.bf16.mxu0 0
    %1365 = vmatpush1.bf16.msra.mxu0 %v1210
    %1366 = vmatprep.subr.bf16.mxu0 0
    %1367 = vmatpush1.bf16.msra.mxu0 %v1211
    %1368 = vmatprep.subr.bf16.mxu0 0
    %1369 = vmatpush1.bf16.msra.mxu0 %v1212
    %1370 = vmatprep.subr.bf16.mxu0 0
    %1371 = vmatpush1.bf16.msra.mxu0 %v1213
    %1372 = vmatprep.subr.bf16.mxu0 0
    %1373 = vmatpush1.bf16.msra.mxu0 %v1214
    %1374 = vmatprep.subr.bf16.mxu0 0
    %1375 = vmatpush1.bf16.msra.mxu0 %v1215
    %1376 = vmatprep.subr.bf16.mxu0 0
    %1377 = vmatpush1.bf16.msra.mxu0 %v1216
    %1378 = vmatprep.subr.bf16.mxu0 0
    %1379 = vmatpush1.bf16.msra.mxu0 %v1217
    %1380 = vmatprep.subr.bf16.mxu0 0
    %1381 = vmatpush1.bf16.msra.mxu0 %v1218
    %1382 = vmatprep.subr.bf16.mxu0 0
    %1383 = vmatpush1.bf16.msra.mxu0 %v1219
    %1384 = vmatprep.subr.bf16.mxu0 0
    %1385 = vmatpush1.bf16.msra.mxu0 %v1220
    %1386 = vmatprep.subr.bf16.mxu0 0
    %1387 = vmatpush1.bf16.msra.mxu0 %v1221
    %1388 = vmatprep.subr.bf16.mxu0 0
    %1389 = vmatpush1.bf16.msra.mxu0 %v1222
    %1390 = vmatprep.subr.bf16.mxu0 0
    %1391 = vmatpush1.bf16.msra.mxu0 %v1223
    %1392 = vmatprep.mubr.bf16.mxu0 %v77
    %1393 = vmatmul.mubr.bf16.gmra.mrb[0].mxu0 %v76
    %v1394 = vpop.f32.mrb[0].mxu0
    %v1395 = vadd.f32 %v1355, %v1394
    %v1396 = vpop.f32.mrb[0].mxu0
    %v1397 = vpop.f32.mrb[0].mxu0
    %v1398 = vpop.f32.mrb[0].mxu0
    %1399 = vdwg.mxu0
    %1400 = vmatprep.subr.bf16.mxu0 0
    %1401 = vmatpush1.bf16.msra.mxu0 %v1224
    %1402 = vmatprep.subr.bf16.mxu0 0
    %1403 = vmatpush1.bf16.msra.mxu0 %v1225
    %1404 = vmatprep.subr.bf16.mxu0 0
    %1405 = vmatpush1.bf16.msra.mxu0 %v1226
    %1406 = vmatprep.subr.bf16.mxu0 0
    %1407 = vmatpush1.bf16.msra.mxu0 %v1227
    %1408 = vmatprep.subr.bf16.mxu0 0
    %1409 = vmatpush1.bf16.msra.mxu0 %v1228
    %1410 = vmatprep.subr.bf16.mxu0 0
    %1411 = vmatpush1.bf16.msra.mxu0 %v1229
    %1412 = vmatprep.subr.bf16.mxu0 0
    %1413 = vmatpush1.bf16.msra.mxu0 %v1230
    %1414 = vmatprep.subr.bf16.mxu0 0
    %1415 = vmatpush1.bf16.msra.mxu0 %v1231
    %1416 = vmatprep.subr.bf16.mxu0 0
    %1417 = vmatpush1.bf16.msra.mxu0 %v1232
    %1418 = vmatprep.subr.bf16.mxu0 0
    %1419 = vmatpush1.bf16.msra.mxu0 %v1233
    %1420 = vmatprep.subr.bf16.mxu0 0
    %1421 = vmatpush1.bf16.msra.mxu0 %v1234
    %1422 = vmatprep.subr.bf16.mxu0 0
    %1423 = vmatpush1.bf16.msra.mxu0 %v1235
    %1424 = vmatprep.subr.bf16.mxu0 0
    %1425 = vmatpush1.bf16.msra.mxu0 %v1236
    %1426 = vmatprep.subr.bf16.mxu0 0
    %1427 = vmatpush1.bf16.msra.mxu0 %v1237
    %1428 = vmatprep.subr.bf16.mxu0 0
    %1429 = vmatpush1.bf16.msra.mxu0 %v1238
    %1430 = vmatprep.subr.bf16.mxu0 0
    %1431 = vmatpush1.bf16.msra.mxu0 %v1239
    %1432 = vmatprep.mubr.bf16.mxu0 %v79
    %1433 = vmatmul.mubr.bf16.gmra.mrb[0].mxu0 %v78
    %v1434 = vpop.f32.mrb[0].mxu0
    %v1435 = vadd.f32 %v1395, %v1434
    %v1436 = vpop.f32.mrb[0].mxu0
    %v1437 = vpop.f32.mrb[0].mxu0
    %v1438 = vpop.f32.mrb[0].mxu0
    %1439 = vdwg.mxu0
    %1440 = vmatprep.subr.bf16.mxu0 0
    %1441 = vmatpush1.bf16.msra.mxu0 %v1240
    %1442 = vmatprep.subr.bf16.mxu0 0
    %1443 = vmatpush1.bf16.msra.mxu0 %v1241
    %1444 = vmatprep.subr.bf16.mxu0 0
    %1445 = vmatpush1.bf16.msra.mxu0 %v1242
    %1446 = vmatprep.subr.bf16.mxu0 0
    %1447 = vmatpush1.bf16.msra.mxu0 %v1243
    %1448 = vmatprep.subr.bf16.mxu0 0
    %1449 = vmatpush1.bf16.msra.mxu0 %v1244
    %1450 = vmatprep.subr.bf16.mxu0 0
    %1451 = vmatpush1.bf16.msra.mxu0 %v1245
    %1452 = vmatprep.subr.bf16.mxu0 0
    %1453 = vmatpush1.bf16.msra.mxu0 %v1246
    %1454 = vmatprep.subr.bf16.mxu0 0
    %1455 = vmatpush1.bf16.msra.mxu0 %v1247
    %1456 = vmatprep.subr.bf16.mxu0 0
    %1457 = vmatpush1.bf16.msra.mxu0 %v1248
    %1458 = vmatprep.subr.bf16.mxu0 0
    %1459 = vmatpush1.bf16.msra.mxu0 %v1249
    %1460 = vmatprep.subr.bf16.mxu0 0
    %1461 = vmatpush1.bf16.msra.mxu0 %v1250
    %1462 = vmatprep.subr.bf16.mxu0 0
    %1463 = vmatpush1.bf16.msra.mxu0 %v1251
    %1464 = vmatprep.subr.bf16.mxu0 0
    %1465 = vmatpush1.bf16.msra.mxu0 %v1252
    %1466 = vmatprep.subr.bf16.mxu0 0
    %1467 = vmatpush1.bf16.msra.mxu0 %v1253
    %1468 = vmatprep.subr.bf16.mxu0 0
    %1469 = vmatpush1.bf16.msra.mxu0 %v1254
    %1470 = vmatprep.subr.bf16.mxu0 0
    %1471 = vmatpush1.bf16.msra.mxu0 %v1255
    %1472 = vmatprep.mubr.bf16.mxu0 %v81
    %1473 = vmatmul.mubr.bf16.gmra.mrb[0].mxu0 %v80
    %v1474 = vpop.f32.mrb[0].mxu0
    %v1475 = vadd.f32 %v1435, %v1474
    %v1476 = vpop.f32.mrb[0].mxu0
    %v1477 = vpop.f32.mrb[0].mxu0
    %v1478 = vpop.f32.mrb[0].mxu0
    %1479 = vdwg.mxu0
    %v1480 = vld [vmem:[%s4] sm:$0x1]
    %v1482 = vlaneseq
    %v1483 = vshrl.u32 %v1482, 7
    %v1484 = vsub.s32 0, %v1483
    %v1485 = vrot.slane %v1480, %v1484
    %v1487 = vadd.f32 %v1475, %v1485
    %v1488 = vlaneseq
    %v1489 = vand.u32 %v1488, 127
    %vm1490 = vcmp.ge.s32.totalorder %v1489, 16
    %vm1491 = vcmp.lt.s32.totalorder %v1489, 20
    %vm1492 = vmand %vm1490, %vm1491
    %v1493 = vsel %vm1492, %v1487, 0.0
    %v1494 = vmul.f32 %v1493, 0.5
    %v1495 = vmul.f32 %v1494, 1.442695
    %v1496 = vpow.pop %v1495
    %v1497 = vld [vmem:[%s5] sm:$0x1]
    %v1498 = vunpack.c.l.bf16 %v1497
    %v1499 = vmul.f32 %v1496, %v1498
    %v1500 = vpack.c.bf16 %v1499, %v1499
    %v1501 = vld [vmem:[%s6] sm:$0xf]
    %v1502 = vld [vmem:[%s6 + $0x4] sm:$0xf]
    %v1503 = vld [vmem:[%s6 + $0x8] sm:$0xf]
    %v1504 = vld [vmem:[%s6 + $0xc] sm:$0xf]
    %v1505 = vld [vmem:[%s6 + $0x10] sm:$0xf]
    %v1506 = vld [vmem:[%s6 + $0x14] sm:$0xf]
    %v1507 = vld [vmem:[%s6 + $0x18] sm:$0xf]
    %v1508 = vld [vmem:[%s6 + $0x1c] sm:$0xf]
    %v1509 = vld [vmem:[%s6 + $0x20] sm:$0xf]
    %v1510 = vld [vmem:[%s6 + $0x24] sm:$0xf]
    %v1511 = vld [vmem:[%s6 + $0x28] sm:$0xf]
    %v1512 = vld [vmem:[%s6 + $0x2c] sm:$0xf]
    %v1513 = vld [vmem:[%s6 + $0x30] sm:$0xf]
    %v1514 = vld [vmem:[%s6 + $0x34] sm:$0xf]
    %v1515 = vld [vmem:[%s6 + $0x38] sm:$0xf]
    %v1516 = vld [vmem:[%s6 + $0x3c] sm:$0xf]
    %v1533 = vunpack.c.l.b16 %v1501
    %v1534 = vunpack.c.l.b16 %v1502
    %v1535 = vunpack.c.l.b16 %v1503
    %v1536 = vunpack.c.l.b16 %v1504
    %v1537 = vunpack.c.l.b16 %v1505
    %v1538 = vunpack.c.l.b16 %v1506
    %v1539 = vunpack.c.l.b16 %v1507
    %v1540 = vunpack.c.l.b16 %v1508
    %v1541 = vunpack.c.l.b16 %v1509
    %v1542 = vunpack.c.l.b16 %v1510
    %v1543 = vunpack.c.l.b16 %v1511
    %v1544 = vunpack.c.l.b16 %v1512
    %v1545 = vunpack.c.l.b16 %v1513
    %v1546 = vunpack.c.l.b16 %v1514
    %v1547 = vunpack.c.l.b16 %v1515
    %v1548 = vunpack.c.l.b16 %v1516
    %v1549 = vpack.c.b16 %v1534, %v1533
    %v1550 = vpack.c.b16 %v1536, %v1535
    %v1551 = vpack.c.b16 %v1538, %v1537
    %v1552 = vpack.c.b16 %v1540, %v1539
    %v1553 = vpack.c.b16 %v1542, %v1541
    %v1554 = vpack.c.b16 %v1544, %v1543
    %v1555 = vpack.c.b16 %v1546, %v1545
    %v1556 = vpack.c.b16 %v1548, %v1547
    %1565 = vmatprep.subr.bf16.mxu0 0
    %1566 = vmatpush1.bf16.msra.mxu0 %v1549
    %1567 = vmatprep.subr.bf16.mxu0 0
    %1568 = vmatpush1.bf16.msra.mxu0 %v1550
    %1569 = vmatprep.subr.bf16.mxu0 0
    %1570 = vmatpush1.bf16.msra.mxu0 %v1551
    %1571 = vmatprep.subr.bf16.mxu0 0
    %1572 = vmatpush1.bf16.msra.mxu0 %v1552
    %1573 = vmatprep.subr.bf16.mxu0 0
    %1574 = vmatpush1.bf16.msra.mxu0 %v1553
    %1575 = vmatprep.subr.bf16.mxu0 0
    %1576 = vmatpush1.bf16.msra.mxu0 %v1554
    %1577 = vmatprep.subr.bf16.mxu0 0
    %1578 = vmatpush1.bf16.msra.mxu0 %v1555
    %1579 = vmatprep.subr.bf16.mxu0 0
    %1580 = vmatpush1.bf16.msra.mxu0 %v1556
    %1581 = vmatprep.subr.bf16.mxu0 0
    %1582 = vmatpush1.bf16.msra.mxu0 0
    %1583 = vmatprep.subr.bf16.mxu0 0
    %1584 = vmatpush1.bf16.msra.mxu0 0
    %1585 = vmatprep.subr.bf16.mxu0 0
    %1586 = vmatpush1.bf16.msra.mxu0 0
    %1587 = vmatprep.subr.bf16.mxu0 0
    %1588 = vmatpush1.bf16.msra.mxu0 0
    %1589 = vmatprep.subr.bf16.mxu0 0
    %1590 = vmatpush1.bf16.msra.mxu0 0
    %1591 = vmatprep.subr.bf16.mxu0 0
    %1592 = vmatpush1.bf16.msra.mxu0 0
    %1593 = vmatprep.subr.bf16.mxu0 0
    %1594 = vmatpush1.bf16.msra.mxu0 0
    %1595 = vmatprep.subr.bf16.mxu0 0
    %1596 = vmatpush1.bf16.msra.mxu0 0
    %1597 = vmatprep.mubr.bf16.mxu0 0
    %1598 = vmatmul.mubr.bf16.gmra.mrb[0].mxu0 %v1500
    %v1599 = vpop.f32.mrb[0].mxu0
    %v1600 = vadd.f32 0.0, %v1599
    %v1601 = vpop.f32.mrb[0].mxu0
    %v1602 = vpop.f32.mrb[0].mxu0
    %v1603 = vpop.f32.mrb[0].mxu0
    %1604 = vdwg.mxu0
    %v1605 = vadd.f32 %v1487, %v1600
    %1606 = vst [vmem:[#allocation2] sm:$0x3] %v1605
    // Predicated region
    $region30: #{classifier_v_forward.1} parent=1 // pred_check
      _
    $region31: #{classifier_v_forward.1} parent=1 // pred_check_branch
      %1608 = sbr.rel (0) target = $region33
    $region32: #{classifier_v_forward.1} parent=1 // pred_region
      %s1610 = ssub.s32 32, 32
      %1611 = vsyncadd [#allocation3], %s1610
      %s1613 = sshll.u32 [#allocation2], 4
      %s1614 = int_to_ptr.vmem [resolvable:$true] %s1613
      %1616 = dma.vmem_to_hbm [thread:$0]  %s1614, 32, %s7, [#allocation3]
    $region33: #{classifier_v_forward.1} parent=1 // pred_fallthru
      _
    // Predicated region
    $region34: #{classifier_v_forward.1} parent=1 // pred_check
      _
    $region35: #{classifier_v_forward.1} parent=1 // pred_check_branch
      %1618 = sbr.rel (0) target = $region37
    $region36: #{classifier_v_forward.1} parent=1 // pred_region
      %1619 = dma.done [#allocation3], 32
    $region37: #{classifier_v_forward.1} parent=1 // pred_fallthru
      _
    %1620 = vsyncpa [#allocation3], 1

</llo_original>
